<compile_context>
chip_gen: v7x
topology: tpu7x:2x2x1
jax: 0.10.0
libtpu: 0.0.40
codegen_flags: <defaults>
</compile_context>

<pallas_src>
import functools
import numpy as np
import jax
import jax.numpy as jnp
from jax.experimental import pallas as pl
from jax.experimental.pallas import tpu as pltpu

C_IN, C_OUT, K = 3, 2, 2
H_IN = W_IN = 31
H_CONV = W_CONV = H_IN - K + 1          # 30
H_POOL = W_POOL = H_CONV // 2           # 15
S = H_POOL * W_POOL                     # 225
KK = C_IN * K * K                       # 12
FLAT = C_OUT * S                        # 450
N_SHIFT = K + 1                         # 3 distinct row/col shifts (di + kh)
N_VIEWS = C_IN * N_SHIFT * N_SHIFT      # 27 de-duplicated im2col views
SLAB = 16                               # batch rows per conv/pool slab
                                        # (multiple of 16 keeps bf16 slices
                                        #  tile-aligned and accs in vregs)


def _round_up(n, m):
    return ((n + m - 1) // m) * m


def glazenet_kernel(p_ref, wc_ref, wfc_ref, bfc_ref, o_ref, pooled_ref, *, bt):
    """One bt-row batch tile per grid step.

    p_ref:      (N_VIEWS, bt, S) bf16 VMEM  de-dup im2col:
                  view[ci*9 + r*3 + s][b, i*15+j] = x[b, ci, 2i+r, 2j+s]
    wc_ref:     (C_OUT*KK,)      f32  SMEM  conv weight, flat [c, ci, kh, kw]
    wfc_ref:    (C_OUT, S, ND)   f32  VMEM  fc weight per conv channel
    bfc_ref:    (1, ND)          f32  VMEM  fc bias (conv bias pre-folded)
    o_ref:      (bt, ND)         f32  VMEM
    pooled_ref: (C_OUT, bt, S)   f32  VMEM scratch (conv+max-pool result)
    """
    # Hoist the 24 conv-weight scalars out of all loops (SMEM scalar reads).
    wc = [wc_ref[i] for i in range(C_OUT * KK)]

    n_slabs = bt // SLAB

    # Conv (VPU scalar-broadcast MACs) fused with max-pool, SLAB rows at a
    # time so acc[2]/pooled[2] stay in vregs (no spills at bt=128).
    @pl.loop(0, n_slabs)
    def _(s):
        off = pl.multiple_of(s * SLAB, SLAB)
        pooled = [None] * C_OUT                            # each (SLAB, S) f32
        for di in range(K):
            for dj in range(K):
                acc = [None] * C_OUT
                for ci in range(C_IN):
                    for kh in range(K):
                        for kw in range(K):
                            # One bf16 load shared by both output channels,
                            # upcast to f32 for the MAC (f32 accumulation).
                            v = p_ref[ci * (N_SHIFT * N_SHIFT)
                                      + (di + kh) * N_SHIFT + (dj + kw),
                                      pl.ds(off, SLAB), :].astype(jnp.float32)
                            for c in range(C_OUT):
                                w = wc[(c * C_IN + ci) * (K * K) + kh * K + kw]
                                t = v * w
                                acc[c] = t if acc[c] is None else acc[c] + t
                for c in range(C_OUT):
                    pooled[c] = acc[c] if pooled[c] is None \
                        else jnp.maximum(pooled[c], acc[c])
        for c in range(C_OUT):
            pooled_ref[c, pl.ds(off, SLAB), :] = pooled[c]

    # FC: full-tile MXU matmuls, one per conv channel, f32 accumulation.
    # Conv bias is already folded into bfc on the host (exact: per-channel
    # constant bias after a max, then a linear layer).
    y = bfc_ref[...]                                       # (1, ND) broadcasts
    for c in range(C_OUT):
        y = y + jnp.dot(pooled_ref[c], wfc_ref[c],
                        preferred_element_type=jnp.float32)          # (bt, ND)
    o_ref[...] = y.astype(o_ref.dtype)


def net_pallas(x, w_conv, b_conv, w_fc, b_fc, *, block_b=128):
    """x: (B, 3, 31, 31) NCHW float32; returns (B, out_D) float32."""
    B = x.shape[0]
    out_D = w_fc.shape[0]

    # ---- tile sizing / padding ----
    # Clamp bt so the grid has ~4 steps when B allows (pipelining + dual-TC
    # on v7x); bt is a multiple of SLAB.  block_b can be raised (e.g. 256 on
    # v6e for very large B).
    bt = min(block_b, max(SLAB, _round_up(max(B // 4, 1), SLAB)))
    bt = _round_up(bt, SLAB)
    B_pad = _round_up(B, bt)
    ND = _round_up(out_D, 128)                             # lane-dense output

    x = x.astype(jnp.float32)
    if B_pad != B:
        x = jnp.pad(x, ((0, B_pad - B), (0, 0), (0, 0), (0, 0)))

    # ---- glue: de-duplicated im2col (27 strided views), streamed as bf16 ----
    # view[ci*9 + r*3 + s][b, i*15 + j] = x[b, ci, 2i + r, 2j + s]
    views = [x[:, ci, r:r + 2 * H_POOL:2, s:s + 2 * W_POOL:2].reshape(B_pad, S)
             for ci in range(C_IN) for r in range(N_SHIFT) for s in range(N_SHIFT)]
    patches = jnp.stack(views, axis=0).astype(jnp.bfloat16)   # (27, B_pad, 225)

    wc = w_conv.reshape(-1).astype(jnp.float32)                # (24,)
    bc = b_conv.reshape(-1).astype(jnp.float32)                # (2,)
    # fc weight column order in the PyTorch flatten is c*225 + i*15 + j.
    wfc_r = w_fc.reshape(out_D, C_OUT, S).transpose(1, 2, 0).astype(jnp.float32)
    wfc_r = jnp.pad(wfc_r, ((0, 0), (0, 0), (0, ND - out_D)))     # (2, 225, ND)
    # Fold the per-channel conv bias into the FC bias (exact).
    bfc = jnp.pad(b_fc.reshape(1, out_D).astype(jnp.float32),
                  ((0, 0), (0, ND - out_D)))                      # (1, ND)
    bfc = bfc + jnp.einsum('c,csd->d', bc, wfc_r)[None, :]

    grid = (B_pad // bt,)
    kernel = functools.partial(glazenet_kernel, bt=bt)
    out = pl.pallas_call(
        kernel,
        out_shape=jax.ShapeDtypeStruct((B_pad, ND), jnp.float32),
        grid=grid,
        in_specs=[
            # streaming input: one (27, bt, 225) bf16 block per batch tile
            pl.BlockSpec((N_VIEWS, bt, S), lambda b: (0, b, 0)),
            # tiny conv weights live in SMEM and are read as scalars
            pl.BlockSpec(memory_space=pltpu.MemorySpace.SMEM),
            # fc params: constant block index -> fetched once, stays resident
            pl.BlockSpec((C_OUT, S, ND), lambda b: (0, 0, 0)),
            pl.BlockSpec((1, ND), lambda b: (0, 0)),
        ],
        out_specs=pl.BlockSpec((bt, ND), lambda b: (b, 0)),
        scratch_shapes=[pltpu.VMEM((C_OUT, bt, S), jnp.float32)],
        compiler_params=pltpu.CompilerParams(
            dimension_semantics=("parallel",),
            vmem_limit_bytes=32 * 1024 * 1024),
    )(patches, wc, wfc_r, bfc)
    return out[:B, :out_D]


def net_reference(x, w_conv, b_conv, w_fc, b_fc):
    """Pure-JAX reference matching the PyTorch forward (f32)."""
    conv = jax.lax.conv_general_dilated(
        x.astype(jnp.float32), w_conv, window_strides=(1, 1), padding="VALID",
        dimension_numbers=("NCHW", "OIHW", "NCHW"),
        precision=jax.lax.Precision.HIGHEST)
    conv = conv + b_conv.reshape(1, C_OUT, 1, 1)
    pooled = jax.lax.reduce_window(conv, -jnp.inf, jax.lax.max,
                                   (1, 1, 2, 2), (1, 1, 2, 2), "VALID")
    flat = pooled.reshape(x.shape[0], -1)
    return jnp.dot(flat, w_fc.T, precision=jax.lax.Precision.HIGHEST) + b_fc


if __name__ == "__main__":
    key = jax.random.PRNGKey(0)
    kx, kwc, kbc, kwf, kbf = jax.random.split(key, 5)

    w_conv = jax.random.normal(kwc, (C_OUT, C_IN, K, K), jnp.float32) * 0.1
    b_conv = jax.random.normal(kbc, (C_OUT,), jnp.float32) * 0.1

    # Tolerance accounts for bf16 streaming of the input patches (f32 accum).
    ATOL = RTOL = 5e-3

    # Cases: tiny batch (single grid step), padded multi-step batch, and a
    # multi-step case with out_D > 128 (exercises the ND lane padding).
    cases = [(2, 10), (20, 10), (40, 200)]
    ok = True
    for B, out_D in cases:
        kx, kwfc, kbfc, kxi = jax.random.split(kx, 4)
        w_fc = jax.random.normal(kwfc, (out_D, FLAT), jnp.float32) * 0.05
        b_fc = jax.random.normal(kbfc, (out_D,), jnp.float32) * 0.05
        x = jax.random.normal(kxi, (B, C_IN, H_IN, W_IN), jnp.float32)

        y = net_pallas(x, w_conv, b_conv, w_fc, b_fc)
        y = jax.block_until_ready(y)
        y_ref = net_reference(x, w_conv, b_conv, w_fc, b_fc)
        if not np.allclose(np.asarray(y), np.asarray(y_ref),
                           atol=ATOL, rtol=RTOL):
            ok = False
    if not ok:
        raise AssertionError("Pallas kernel result does not match reference")
    print("KERNEL_OK")
</pallas_src>

<mosaic_0001>
module attributes {stable_mosaic.version = 11 : i64} {
  func.func @glazenet_kernel(%arg0: i32, %arg1: memref<27x16x225xbf16, #tpu.memory_space<vmem>>, %arg2: memref<24xf32, #tpu.memory_space<smem>>, %arg3: memref<2x225x128xf32, #tpu.memory_space<vmem>>, %arg4: memref<1x128xf32, #tpu.memory_space<vmem>>, %arg5: memref<16x128xf32, #tpu.memory_space<vmem>>, %arg6: memref<2x16x225xf32, #tpu.memory_space<vmem>>) attributes {dimension_semantics = [#tpu.dimension_semantics<parallel>], iteration_bounds = array<i64: 1>, scalar_prefetch = 0 : i64, scratch_operands = 1 : i64, tpu.core_type = #tpu.core_type<tc>, window_params = [{transform_indices = @transform_0, window_bounds = array<i64: 27, 16, 225>}, {transform_indices = @transform_1, window_bounds = array<i64: 24>}, {pipeline_mode = #tpu.pipeline_mode<synchronous>, transform_indices = @transform_2, window_bounds = array<i64: 2, 225, 128>}, {pipeline_mode = #tpu.pipeline_mode<synchronous>, transform_indices = @transform_3, window_bounds = array<i64: 1, 128>}, {transform_indices = @transform_4, window_bounds = array<i64: 16, 128>}]} {
    %c0 = arith.constant 0 : index
    %0 = memref.load %arg2[%c0] : memref<24xf32, #tpu.memory_space<smem>>
    %c1 = arith.constant 1 : index
    %1 = memref.load %arg2[%c1] : memref<24xf32, #tpu.memory_space<smem>>
    %c2 = arith.constant 2 : index
    %2 = memref.load %arg2[%c2] : memref<24xf32, #tpu.memory_space<smem>>
    %c3 = arith.constant 3 : index
    %3 = memref.load %arg2[%c3] : memref<24xf32, #tpu.memory_space<smem>>
    %c4 = arith.constant 4 : index
    %4 = memref.load %arg2[%c4] : memref<24xf32, #tpu.memory_space<smem>>
    %c5 = arith.constant 5 : index
    %5 = memref.load %arg2[%c5] : memref<24xf32, #tpu.memory_space<smem>>
    %c6 = arith.constant 6 : index
    %6 = memref.load %arg2[%c6] : memref<24xf32, #tpu.memory_space<smem>>
    %c7 = arith.constant 7 : index
    %7 = memref.load %arg2[%c7] : memref<24xf32, #tpu.memory_space<smem>>
    %c8 = arith.constant 8 : index
    %8 = memref.load %arg2[%c8] : memref<24xf32, #tpu.memory_space<smem>>
    %c9 = arith.constant 9 : index
    %9 = memref.load %arg2[%c9] : memref<24xf32, #tpu.memory_space<smem>>
    %c10 = arith.constant 10 : index
    %10 = memref.load %arg2[%c10] : memref<24xf32, #tpu.memory_space<smem>>
    %c11 = arith.constant 11 : index
    %11 = memref.load %arg2[%c11] : memref<24xf32, #tpu.memory_space<smem>>
    %c12 = arith.constant 12 : index
    %12 = memref.load %arg2[%c12] : memref<24xf32, #tpu.memory_space<smem>>
    %c13 = arith.constant 13 : index
    %13 = memref.load %arg2[%c13] : memref<24xf32, #tpu.memory_space<smem>>
    %c14 = arith.constant 14 : index
    %14 = memref.load %arg2[%c14] : memref<24xf32, #tpu.memory_space<smem>>
    %c15 = arith.constant 15 : index
    %15 = memref.load %arg2[%c15] : memref<24xf32, #tpu.memory_space<smem>>
    %c16 = arith.constant 16 : index
    %16 = memref.load %arg2[%c16] : memref<24xf32, #tpu.memory_space<smem>>
    %c17 = arith.constant 17 : index
    %17 = memref.load %arg2[%c17] : memref<24xf32, #tpu.memory_space<smem>>
    %c18 = arith.constant 18 : index
    %18 = memref.load %arg2[%c18] : memref<24xf32, #tpu.memory_space<smem>>
    %c19 = arith.constant 19 : index
    %19 = memref.load %arg2[%c19] : memref<24xf32, #tpu.memory_space<smem>>
    %c20 = arith.constant 20 : index
    %20 = memref.load %arg2[%c20] : memref<24xf32, #tpu.memory_space<smem>>
    %c21 = arith.constant 21 : index
    %21 = memref.load %arg2[%c21] : memref<24xf32, #tpu.memory_space<smem>>
    %c22 = arith.constant 22 : index
    %22 = memref.load %arg2[%c22] : memref<24xf32, #tpu.memory_space<smem>>
    %c23 = arith.constant 23 : index
    %23 = memref.load %arg2[%c23] : memref<24xf32, #tpu.memory_space<smem>>
    %c0_i32 = arith.constant 0 : i32
    %c1_i32 = arith.constant 1 : i32
    %24 = arith.muli %c0_i32, %c1_i32 : i32
    %c0_i32_0 = arith.constant 0 : i32
    %25 = arith.addi %c0_i32_0, %24 : i32
    %c16_i32 = arith.constant 16 : i32
    %26 = arith.muli %25, %c16_i32 : i32
    %27 = tpu.assume_multiple %26, 16 : i32
    %c0_1 = arith.constant 0 : index
    %28 = arith.index_cast %27 : i32 to index
    %c0_2 = arith.constant 0 : index
    %29 = vector.load %arg1[%c0_1, %28, %c0_2] : memref<27x16x225xbf16, #tpu.memory_space<vmem>>, vector<1x16x225xbf16>
    %30 = vector.shape_cast %29 : vector<1x16x225xbf16> to vector<16x225xbf16>
    %31 = arith.extf %30 : vector<16x225xbf16> to vector<16x225xf32>
    %32 = vector.broadcast %0 : f32 to vector<16x225xf32>
    %33 = arith.mulf %31, %32 : vector<16x225xf32>
    %34 = vector.broadcast %12 : f32 to vector<16x225xf32>
    %35 = arith.mulf %31, %34 : vector<16x225xf32>
    %c1_3 = arith.constant 1 : index
    %36 = arith.index_cast %27 : i32 to index
    %c0_4 = arith.constant 0 : index
    %37 = vector.load %arg1[%c1_3, %36, %c0_4] : memref<27x16x225xbf16, #tpu.memory_space<vmem>>, vector<1x16x225xbf16>
    %38 = vector.shape_cast %37 : vector<1x16x225xbf16> to vector<16x225xbf16>
    %39 = arith.extf %38 : vector<16x225xbf16> to vector<16x225xf32>
    %40 = vector.broadcast %1 : f32 to vector<16x225xf32>
    %41 = arith.mulf %39, %40 : vector<16x225xf32>
    %42 = arith.addf %33, %41 : vector<16x225xf32>
    %43 = vector.broadcast %13 : f32 to vector<16x225xf32>
    %44 = arith.mulf %39, %43 : vector<16x225xf32>
    %45 = arith.addf %35, %44 : vector<16x225xf32>
    %c3_5 = arith.constant 3 : index
    %46 = arith.index_cast %27 : i32 to index
    %c0_6 = arith.constant 0 : index
    %47 = vector.load %arg1[%c3_5, %46, %c0_6] : memref<27x16x225xbf16, #tpu.memory_space<vmem>>, vector<1x16x225xbf16>
    %48 = vector.shape_cast %47 : vector<1x16x225xbf16> to vector<16x225xbf16>
    %49 = arith.extf %48 : vector<16x225xbf16> to vector<16x225xf32>
    %50 = vector.broadcast %2 : f32 to vector<16x225xf32>
    %51 = arith.mulf %49, %50 : vector<16x225xf32>
    %52 = arith.addf %42, %51 : vector<16x225xf32>
    %53 = vector.broadcast %14 : f32 to vector<16x225xf32>
    %54 = arith.mulf %49, %53 : vector<16x225xf32>
    %55 = arith.addf %45, %54 : vector<16x225xf32>
    %c4_7 = arith.constant 4 : index
    %56 = arith.index_cast %27 : i32 to index
    %c0_8 = arith.constant 0 : index
    %57 = vector.load %arg1[%c4_7, %56, %c0_8] : memref<27x16x225xbf16, #tpu.memory_space<vmem>>, vector<1x16x225xbf16>
    %58 = vector.shape_cast %57 : vector<1x16x225xbf16> to vector<16x225xbf16>
    %59 = arith.extf %58 : vector<16x225xbf16> to vector<16x225xf32>
    %60 = vector.broadcast %3 : f32 to vector<16x225xf32>
    %61 = arith.mulf %59, %60 : vector<16x225xf32>
    %62 = arith.addf %52, %61 : vector<16x225xf32>
    %63 = vector.broadcast %15 : f32 to vector<16x225xf32>
    %64 = arith.mulf %59, %63 : vector<16x225xf32>
    %65 = arith.addf %55, %64 : vector<16x225xf32>
    %c9_9 = arith.constant 9 : index
    %66 = arith.index_cast %27 : i32 to index
    %c0_10 = arith.constant 0 : index
    %67 = vector.load %arg1[%c9_9, %66, %c0_10] : memref<27x16x225xbf16, #tpu.memory_space<vmem>>, vector<1x16x225xbf16>
    %68 = vector.shape_cast %67 : vector<1x16x225xbf16> to vector<16x225xbf16>
    %69 = arith.extf %68 : vector<16x225xbf16> to vector<16x225xf32>
    %70 = vector.broadcast %4 : f32 to vector<16x225xf32>
    %71 = arith.mulf %69, %70 : vector<16x225xf32>
    %72 = arith.addf %62, %71 : vector<16x225xf32>
    %73 = vector.broadcast %16 : f32 to vector<16x225xf32>
    %74 = arith.mulf %69, %73 : vector<16x225xf32>
    %75 = arith.addf %65, %74 : vector<16x225xf32>
    %c10_11 = arith.constant 10 : index
    %76 = arith.index_cast %27 : i32 to index
    %c0_12 = arith.constant 0 : index
    %77 = vector.load %arg1[%c10_11, %76, %c0_12] : memref<27x16x225xbf16, #tpu.memory_space<vmem>>, vector<1x16x225xbf16>
    %78 = vector.shape_cast %77 : vector<1x16x225xbf16> to vector<16x225xbf16>
    %79 = arith.extf %78 : vector<16x225xbf16> to vector<16x225xf32>
    %80 = vector.broadcast %5 : f32 to vector<16x225xf32>
    %81 = arith.mulf %79, %80 : vector<16x225xf32>
    %82 = arith.addf %72, %81 : vector<16x225xf32>
    %83 = vector.broadcast %17 : f32 to vector<16x225xf32>
    %84 = arith.mulf %79, %83 : vector<16x225xf32>
    %85 = arith.addf %75, %84 : vector<16x225xf32>
    %c12_13 = arith.constant 12 : index
    %86 = arith.index_cast %27 : i32 to index
    %c0_14 = arith.constant 0 : index
    %87 = vector.load %arg1[%c12_13, %86, %c0_14] : memref<27x16x225xbf16, #tpu.memory_space<vmem>>, vector<1x16x225xbf16>
    %88 = vector.shape_cast %87 : vector<1x16x225xbf16> to vector<16x225xbf16>
    %89 = arith.extf %88 : vector<16x225xbf16> to vector<16x225xf32>
    %90 = vector.broadcast %6 : f32 to vector<16x225xf32>
    %91 = arith.mulf %89, %90 : vector<16x225xf32>
    %92 = arith.addf %82, %91 : vector<16x225xf32>
    %93 = vector.broadcast %18 : f32 to vector<16x225xf32>
    %94 = arith.mulf %89, %93 : vector<16x225xf32>
    %95 = arith.addf %85, %94 : vector<16x225xf32>
    %c13_15 = arith.constant 13 : index
    %96 = arith.index_cast %27 : i32 to index
    %c0_16 = arith.constant 0 : index
    %97 = vector.load %arg1[%c13_15, %96, %c0_16] : memref<27x16x225xbf16, #tpu.memory_space<vmem>>, vector<1x16x225xbf16>
    %98 = vector.shape_cast %97 : vector<1x16x225xbf16> to vector<16x225xbf16>
    %99 = arith.extf %98 : vector<16x225xbf16> to vector<16x225xf32>
    %100 = vector.broadcast %7 : f32 to vector<16x225xf32>
    %101 = arith.mulf %99, %100 : vector<16x225xf32>
    %102 = arith.addf %92, %101 : vector<16x225xf32>
    %103 = vector.broadcast %19 : f32 to vector<16x225xf32>
    %104 = arith.mulf %99, %103 : vector<16x225xf32>
    %105 = arith.addf %95, %104 : vector<16x225xf32>
    %c18_17 = arith.constant 18 : index
    %106 = arith.index_cast %27 : i32 to index
    %c0_18 = arith.constant 0 : index
    %107 = vector.load %arg1[%c18_17, %106, %c0_18] : memref<27x16x225xbf16, #tpu.memory_space<vmem>>, vector<1x16x225xbf16>
    %108 = vector.shape_cast %107 : vector<1x16x225xbf16> to vector<16x225xbf16>
    %109 = arith.extf %108 : vector<16x225xbf16> to vector<16x225xf32>
    %110 = vector.broadcast %8 : f32 to vector<16x225xf32>
    %111 = arith.mulf %109, %110 : vector<16x225xf32>
    %112 = arith.addf %102, %111 : vector<16x225xf32>
    %113 = vector.broadcast %20 : f32 to vector<16x225xf32>
    %114 = arith.mulf %109, %113 : vector<16x225xf32>
    %115 = arith.addf %105, %114 : vector<16x225xf32>
    %c19_19 = arith.constant 19 : index
    %116 = arith.index_cast %27 : i32 to index
    %c0_20 = arith.constant 0 : index
    %117 = vector.load %arg1[%c19_19, %116, %c0_20] : memref<27x16x225xbf16, #tpu.memory_space<vmem>>, vector<1x16x225xbf16>
    %118 = vector.shape_cast %117 : vector<1x16x225xbf16> to vector<16x225xbf16>
    %119 = arith.extf %118 : vector<16x225xbf16> to vector<16x225xf32>
    %120 = vector.broadcast %9 : f32 to vector<16x225xf32>
    %121 = arith.mulf %119, %120 : vector<16x225xf32>
    %122 = arith.addf %112, %121 : vector<16x225xf32>
    %123 = vector.broadcast %21 : f32 to vector<16x225xf32>
    %124 = arith.mulf %119, %123 : vector<16x225xf32>
    %125 = arith.addf %115, %124 : vector<16x225xf32>
    %c21_21 = arith.constant 21 : index
    %126 = arith.index_cast %27 : i32 to index
    %c0_22 = arith.constant 0 : index
    %127 = vector.load %arg1[%c21_21, %126, %c0_22] : memref<27x16x225xbf16, #tpu.memory_space<vmem>>, vector<1x16x225xbf16>
    %128 = vector.shape_cast %127 : vector<1x16x225xbf16> to vector<16x225xbf16>
    %129 = arith.extf %128 : vector<16x225xbf16> to vector<16x225xf32>
    %130 = vector.broadcast %10 : f32 to vector<16x225xf32>
    %131 = arith.mulf %129, %130 : vector<16x225xf32>
    %132 = arith.addf %122, %131 : vector<16x225xf32>
    %133 = vector.broadcast %22 : f32 to vector<16x225xf32>
    %134 = arith.mulf %129, %133 : vector<16x225xf32>
    %135 = arith.addf %125, %134 : vector<16x225xf32>
    %c22_23 = arith.constant 22 : index
    %136 = arith.index_cast %27 : i32 to index
    %c0_24 = arith.constant 0 : index
    %137 = vector.load %arg1[%c22_23, %136, %c0_24] : memref<27x16x225xbf16, #tpu.memory_space<vmem>>, vector<1x16x225xbf16>
    %138 = vector.shape_cast %137 : vector<1x16x225xbf16> to vector<16x225xbf16>
    %139 = arith.extf %138 : vector<16x225xbf16> to vector<16x225xf32>
    %140 = vector.broadcast %11 : f32 to vector<16x225xf32>
    %141 = arith.mulf %139, %140 : vector<16x225xf32>
    %142 = arith.addf %132, %141 : vector<16x225xf32>
    %143 = vector.broadcast %23 : f32 to vector<16x225xf32>
    %144 = arith.mulf %139, %143 : vector<16x225xf32>
    %145 = arith.addf %135, %144 : vector<16x225xf32>
    %c1_25 = arith.constant 1 : index
    %146 = arith.index_cast %27 : i32 to index
    %c0_26 = arith.constant 0 : index
    %147 = vector.load %arg1[%c1_25, %146, %c0_26] : memref<27x16x225xbf16, #tpu.memory_space<vmem>>, vector<1x16x225xbf16>
    %148 = vector.shape_cast %147 : vector<1x16x225xbf16> to vector<16x225xbf16>
    %149 = arith.extf %148 : vector<16x225xbf16> to vector<16x225xf32>
    %150 = vector.broadcast %0 : f32 to vector<16x225xf32>
    %151 = arith.mulf %149, %150 : vector<16x225xf32>
    %152 = vector.broadcast %12 : f32 to vector<16x225xf32>
    %153 = arith.mulf %149, %152 : vector<16x225xf32>
    %c2_27 = arith.constant 2 : index
    %154 = arith.index_cast %27 : i32 to index
    %c0_28 = arith.constant 0 : index
    %155 = vector.load %arg1[%c2_27, %154, %c0_28] : memref<27x16x225xbf16, #tpu.memory_space<vmem>>, vector<1x16x225xbf16>
    %156 = vector.shape_cast %155 : vector<1x16x225xbf16> to vector<16x225xbf16>
    %157 = arith.extf %156 : vector<16x225xbf16> to vector<16x225xf32>
    %158 = vector.broadcast %1 : f32 to vector<16x225xf32>
    %159 = arith.mulf %157, %158 : vector<16x225xf32>
    %160 = arith.addf %151, %159 : vector<16x225xf32>
    %161 = vector.broadcast %13 : f32 to vector<16x225xf32>
    %162 = arith.mulf %157, %161 : vector<16x225xf32>
    %163 = arith.addf %153, %162 : vector<16x225xf32>
    %c4_29 = arith.constant 4 : index
    %164 = arith.index_cast %27 : i32 to index
    %c0_30 = arith.constant 0 : index
    %165 = vector.load %arg1[%c4_29, %164, %c0_30] : memref<27x16x225xbf16, #tpu.memory_space<vmem>>, vector<1x16x225xbf16>
    %166 = vector.shape_cast %165 : vector<1x16x225xbf16> to vector<16x225xbf16>
    %167 = arith.extf %166 : vector<16x225xbf16> to vector<16x225xf32>
    %168 = vector.broadcast %2 : f32 to vector<16x225xf32>
    %169 = arith.mulf %167, %168 : vector<16x225xf32>
    %170 = arith.addf %160, %169 : vector<16x225xf32>
    %171 = vector.broadcast %14 : f32 to vector<16x225xf32>
    %172 = arith.mulf %167, %171 : vector<16x225xf32>
    %173 = arith.addf %163, %172 : vector<16x225xf32>
    %c5_31 = arith.constant 5 : index
    %174 = arith.index_cast %27 : i32 to index
    %c0_32 = arith.constant 0 : index
    %175 = vector.load %arg1[%c5_31, %174, %c0_32] : memref<27x16x225xbf16, #tpu.memory_space<vmem>>, vector<1x16x225xbf16>
    %176 = vector.shape_cast %175 : vector<1x16x225xbf16> to vector<16x225xbf16>
    %177 = arith.extf %176 : vector<16x225xbf16> to vector<16x225xf32>
    %178 = vector.broadcast %3 : f32 to vector<16x225xf32>
    %179 = arith.mulf %177, %178 : vector<16x225xf32>
    %180 = arith.addf %170, %179 : vector<16x225xf32>
    %181 = vector.broadcast %15 : f32 to vector<16x225xf32>
    %182 = arith.mulf %177, %181 : vector<16x225xf32>
    %183 = arith.addf %173, %182 : vector<16x225xf32>
    %c10_33 = arith.constant 10 : index
    %184 = arith.index_cast %27 : i32 to index
    %c0_34 = arith.constant 0 : index
    %185 = vector.load %arg1[%c10_33, %184, %c0_34] : memref<27x16x225xbf16, #tpu.memory_space<vmem>>, vector<1x16x225xbf16>
    %186 = vector.shape_cast %185 : vector<1x16x225xbf16> to vector<16x225xbf16>
    %187 = arith.extf %186 : vector<16x225xbf16> to vector<16x225xf32>
    %188 = vector.broadcast %4 : f32 to vector<16x225xf32>
    %189 = arith.mulf %187, %188 : vector<16x225xf32>
    %190 = arith.addf %180, %189 : vector<16x225xf32>
    %191 = vector.broadcast %16 : f32 to vector<16x225xf32>
    %192 = arith.mulf %187, %191 : vector<16x225xf32>
    %193 = arith.addf %183, %192 : vector<16x225xf32>
    %c11_35 = arith.constant 11 : index
    %194 = arith.index_cast %27 : i32 to index
    %c0_36 = arith.constant 0 : index
    %195 = vector.load %arg1[%c11_35, %194, %c0_36] : memref<27x16x225xbf16, #tpu.memory_space<vmem>>, vector<1x16x225xbf16>
    %196 = vector.shape_cast %195 : vector<1x16x225xbf16> to vector<16x225xbf16>
    %197 = arith.extf %196 : vector<16x225xbf16> to vector<16x225xf32>
    %198 = vector.broadcast %5 : f32 to vector<16x225xf32>
    %199 = arith.mulf %197, %198 : vector<16x225xf32>
    %200 = arith.addf %190, %199 : vector<16x225xf32>
    %201 = vector.broadcast %17 : f32 to vector<16x225xf32>
    %202 = arith.mulf %197, %201 : vector<16x225xf32>
    %203 = arith.addf %193, %202 : vector<16x225xf32>
    %c13_37 = arith.constant 13 : index
    %204 = arith.index_cast %27 : i32 to index
    %c0_38 = arith.constant 0 : index
    %205 = vector.load %arg1[%c13_37, %204, %c0_38] : memref<27x16x225xbf16, #tpu.memory_space<vmem>>, vector<1x16x225xbf16>
    %206 = vector.shape_cast %205 : vector<1x16x225xbf16> to vector<16x225xbf16>
    %207 = arith.extf %206 : vector<16x225xbf16> to vector<16x225xf32>
    %208 = vector.broadcast %6 : f32 to vector<16x225xf32>
    %209 = arith.mulf %207, %208 : vector<16x225xf32>
    %210 = arith.addf %200, %209 : vector<16x225xf32>
    %211 = vector.broadcast %18 : f32 to vector<16x225xf32>
    %212 = arith.mulf %207, %211 : vector<16x225xf32>
    %213 = arith.addf %203, %212 : vector<16x225xf32>
    %c14_39 = arith.constant 14 : index
    %214 = arith.index_cast %27 : i32 to index
    %c0_40 = arith.constant 0 : index
    %215 = vector.load %arg1[%c14_39, %214, %c0_40] : memref<27x16x225xbf16, #tpu.memory_space<vmem>>, vector<1x16x225xbf16>
    %216 = vector.shape_cast %215 : vector<1x16x225xbf16> to vector<16x225xbf16>
    %217 = arith.extf %216 : vector<16x225xbf16> to vector<16x225xf32>
    %218 = vector.broadcast %7 : f32 to vector<16x225xf32>
    %219 = arith.mulf %217, %218 : vector<16x225xf32>
    %220 = arith.addf %210, %219 : vector<16x225xf32>
    %221 = vector.broadcast %19 : f32 to vector<16x225xf32>
    %222 = arith.mulf %217, %221 : vector<16x225xf32>
    %223 = arith.addf %213, %222 : vector<16x225xf32>
    %c19_41 = arith.constant 19 : index
    %224 = arith.index_cast %27 : i32 to index
    %c0_42 = arith.constant 0 : index
    %225 = vector.load %arg1[%c19_41, %224, %c0_42] : memref<27x16x225xbf16, #tpu.memory_space<vmem>>, vector<1x16x225xbf16>
    %226 = vector.shape_cast %225 : vector<1x16x225xbf16> to vector<16x225xbf16>
    %227 = arith.extf %226 : vector<16x225xbf16> to vector<16x225xf32>
    %228 = vector.broadcast %8 : f32 to vector<16x225xf32>
    %229 = arith.mulf %227, %228 : vector<16x225xf32>
    %230 = arith.addf %220, %229 : vector<16x225xf32>
    %231 = vector.broadcast %20 : f32 to vector<16x225xf32>
    %232 = arith.mulf %227, %231 : vector<16x225xf32>
    %233 = arith.addf %223, %232 : vector<16x225xf32>
    %c20_43 = arith.constant 20 : index
    %234 = arith.index_cast %27 : i32 to index
    %c0_44 = arith.constant 0 : index
    %235 = vector.load %arg1[%c20_43, %234, %c0_44] : memref<27x16x225xbf16, #tpu.memory_space<vmem>>, vector<1x16x225xbf16>
    %236 = vector.shape_cast %235 : vector<1x16x225xbf16> to vector<16x225xbf16>
    %237 = arith.extf %236 : vector<16x225xbf16> to vector<16x225xf32>
    %238 = vector.broadcast %9 : f32 to vector<16x225xf32>
    %239 = arith.mulf %237, %238 : vector<16x225xf32>
    %240 = arith.addf %230, %239 : vector<16x225xf32>
    %241 = vector.broadcast %21 : f32 to vector<16x225xf32>
    %242 = arith.mulf %237, %241 : vector<16x225xf32>
    %243 = arith.addf %233, %242 : vector<16x225xf32>
    %c22_45 = arith.constant 22 : index
    %244 = arith.index_cast %27 : i32 to index
    %c0_46 = arith.constant 0 : index
    %245 = vector.load %arg1[%c22_45, %244, %c0_46] : memref<27x16x225xbf16, #tpu.memory_space<vmem>>, vector<1x16x225xbf16>
    %246 = vector.shape_cast %245 : vector<1x16x225xbf16> to vector<16x225xbf16>
    %247 = arith.extf %246 : vector<16x225xbf16> to vector<16x225xf32>
    %248 = vector.broadcast %10 : f32 to vector<16x225xf32>
    %249 = arith.mulf %247, %248 : vector<16x225xf32>
    %250 = arith.addf %240, %249 : vector<16x225xf32>
    %251 = vector.broadcast %22 : f32 to vector<16x225xf32>
    %252 = arith.mulf %247, %251 : vector<16x225xf32>
    %253 = arith.addf %243, %252 : vector<16x225xf32>
    %c23_47 = arith.constant 23 : index
    %254 = arith.index_cast %27 : i32 to index
    %c0_48 = arith.constant 0 : index
    %255 = vector.load %arg1[%c23_47, %254, %c0_48] : memref<27x16x225xbf16, #tpu.memory_space<vmem>>, vector<1x16x225xbf16>
    %256 = vector.shape_cast %255 : vector<1x16x225xbf16> to vector<16x225xbf16>
    %257 = arith.extf %256 : vector<16x225xbf16> to vector<16x225xf32>
    %258 = vector.broadcast %11 : f32 to vector<16x225xf32>
    %259 = arith.mulf %257, %258 : vector<16x225xf32>
    %260 = arith.addf %250, %259 : vector<16x225xf32>
    %261 = vector.broadcast %23 : f32 to vector<16x225xf32>
    %262 = arith.mulf %257, %261 : vector<16x225xf32>
    %263 = arith.addf %253, %262 : vector<16x225xf32>
    %264 = arith.maximumf %142, %260 : vector<16x225xf32>
    %265 = arith.maximumf %145, %263 : vector<16x225xf32>
    %c3_49 = arith.constant 3 : index
    %266 = arith.index_cast %27 : i32 to index
    %c0_50 = arith.constant 0 : index
    %267 = vector.load %arg1[%c3_49, %266, %c0_50] : memref<27x16x225xbf16, #tpu.memory_space<vmem>>, vector<1x16x225xbf16>
    %268 = vector.shape_cast %267 : vector<1x16x225xbf16> to vector<16x225xbf16>
    %269 = arith.extf %268 : vector<16x225xbf16> to vector<16x225xf32>
    %270 = vector.broadcast %0 : f32 to vector<16x225xf32>
    %271 = arith.mulf %269, %270 : vector<16x225xf32>
    %272 = vector.broadcast %12 : f32 to vector<16x225xf32>
    %273 = arith.mulf %269, %272 : vector<16x225xf32>
    %c4_51 = arith.constant 4 : index
    %274 = arith.index_cast %27 : i32 to index
    %c0_52 = arith.constant 0 : index
    %275 = vector.load %arg1[%c4_51, %274, %c0_52] : memref<27x16x225xbf16, #tpu.memory_space<vmem>>, vector<1x16x225xbf16>
    %276 = vector.shape_cast %275 : vector<1x16x225xbf16> to vector<16x225xbf16>
    %277 = arith.extf %276 : vector<16x225xbf16> to vector<16x225xf32>
    %278 = vector.broadcast %1 : f32 to vector<16x225xf32>
    %279 = arith.mulf %277, %278 : vector<16x225xf32>
    %280 = arith.addf %271, %279 : vector<16x225xf32>
    %281 = vector.broadcast %13 : f32 to vector<16x225xf32>
    %282 = arith.mulf %277, %281 : vector<16x225xf32>
    %283 = arith.addf %273, %282 : vector<16x225xf32>
    %c6_53 = arith.constant 6 : index
    %284 = arith.index_cast %27 : i32 to index
    %c0_54 = arith.constant 0 : index
    %285 = vector.load %arg1[%c6_53, %284, %c0_54] : memref<27x16x225xbf16, #tpu.memory_space<vmem>>, vector<1x16x225xbf16>
    %286 = vector.shape_cast %285 : vector<1x16x225xbf16> to vector<16x225xbf16>
    %287 = arith.extf %286 : vector<16x225xbf16> to vector<16x225xf32>
    %288 = vector.broadcast %2 : f32 to vector<16x225xf32>
    %289 = arith.mulf %287, %288 : vector<16x225xf32>
    %290 = arith.addf %280, %289 : vector<16x225xf32>
    %291 = vector.broadcast %14 : f32 to vector<16x225xf32>
    %292 = arith.mulf %287, %291 : vector<16x225xf32>
    %293 = arith.addf %283, %292 : vector<16x225xf32>
    %c7_55 = arith.constant 7 : index
    %294 = arith.index_cast %27 : i32 to index
    %c0_56 = arith.constant 0 : index
    %295 = vector.load %arg1[%c7_55, %294, %c0_56] : memref<27x16x225xbf16, #tpu.memory_space<vmem>>, vector<1x16x225xbf16>
    %296 = vector.shape_cast %295 : vector<1x16x225xbf16> to vector<16x225xbf16>
    %297 = arith.extf %296 : vector<16x225xbf16> to vector<16x225xf32>
    %298 = vector.broadcast %3 : f32 to vector<16x225xf32>
    %299 = arith.mulf %297, %298 : vector<16x225xf32>
    %300 = arith.addf %290, %299 : vector<16x225xf32>
    %301 = vector.broadcast %15 : f32 to vector<16x225xf32>
    %302 = arith.mulf %297, %301 : vector<16x225xf32>
    %303 = arith.addf %293, %302 : vector<16x225xf32>
    %c12_57 = arith.constant 12 : index
    %304 = arith.index_cast %27 : i32 to index
    %c0_58 = arith.constant 0 : index
    %305 = vector.load %arg1[%c12_57, %304, %c0_58] : memref<27x16x225xbf16, #tpu.memory_space<vmem>>, vector<1x16x225xbf16>
    %306 = vector.shape_cast %305 : vector<1x16x225xbf16> to vector<16x225xbf16>
    %307 = arith.extf %306 : vector<16x225xbf16> to vector<16x225xf32>
    %308 = vector.broadcast %4 : f32 to vector<16x225xf32>
    %309 = arith.mulf %307, %308 : vector<16x225xf32>
    %310 = arith.addf %300, %309 : vector<16x225xf32>
    %311 = vector.broadcast %16 : f32 to vector<16x225xf32>
    %312 = arith.mulf %307, %311 : vector<16x225xf32>
    %313 = arith.addf %303, %312 : vector<16x225xf32>
    %c13_59 = arith.constant 13 : index
    %314 = arith.index_cast %27 : i32 to index
    %c0_60 = arith.constant 0 : index
    %315 = vector.load %arg1[%c13_59, %314, %c0_60] : memref<27x16x225xbf16, #tpu.memory_space<vmem>>, vector<1x16x225xbf16>
    %316 = vector.shape_cast %315 : vector<1x16x225xbf16> to vector<16x225xbf16>
    %317 = arith.extf %316 : vector<16x225xbf16> to vector<16x225xf32>
    %318 = vector.broadcast %5 : f32 to vector<16x225xf32>
    %319 = arith.mulf %317, %318 : vector<16x225xf32>
    %320 = arith.addf %310, %319 : vector<16x225xf32>
    %321 = vector.broadcast %17 : f32 to vector<16x225xf32>
    %322 = arith.mulf %317, %321 : vector<16x225xf32>
    %323 = arith.addf %313, %322 : vector<16x225xf32>
    %c15_61 = arith.constant 15 : index
    %324 = arith.index_cast %27 : i32 to index
    %c0_62 = arith.constant 0 : index
    %325 = vector.load %arg1[%c15_61, %324, %c0_62] : memref<27x16x225xbf16, #tpu.memory_space<vmem>>, vector<1x16x225xbf16>
    %326 = vector.shape_cast %325 : vector<1x16x225xbf16> to vector<16x225xbf16>
    %327 = arith.extf %326 : vector<16x225xbf16> to vector<16x225xf32>
    %328 = vector.broadcast %6 : f32 to vector<16x225xf32>
    %329 = arith.mulf %327, %328 : vector<16x225xf32>
    %330 = arith.addf %320, %329 : vector<16x225xf32>
    %331 = vector.broadcast %18 : f32 to vector<16x225xf32>
    %332 = arith.mulf %327, %331 : vector<16x225xf32>
    %333 = arith.addf %323, %332 : vector<16x225xf32>
    %c16_63 = arith.constant 16 : index
    %334 = arith.index_cast %27 : i32 to index
    %c0_64 = arith.constant 0 : index
    %335 = vector.load %arg1[%c16_63, %334, %c0_64] : memref<27x16x225xbf16, #tpu.memory_space<vmem>>, vector<1x16x225xbf16>
    %336 = vector.shape_cast %335 : vector<1x16x225xbf16> to vector<16x225xbf16>
    %337 = arith.extf %336 : vector<16x225xbf16> to vector<16x225xf32>
    %338 = vector.broadcast %7 : f32 to vector<16x225xf32>
    %339 = arith.mulf %337, %338 : vector<16x225xf32>
    %340 = arith.addf %330, %339 : vector<16x225xf32>
    %341 = vector.broadcast %19 : f32 to vector<16x225xf32>
    %342 = arith.mulf %337, %341 : vector<16x225xf32>
    %343 = arith.addf %333, %342 : vector<16x225xf32>
    %c21_65 = arith.constant 21 : index
    %344 = arith.index_cast %27 : i32 to index
    %c0_66 = arith.constant 0 : index
    %345 = vector.load %arg1[%c21_65, %344, %c0_66] : memref<27x16x225xbf16, #tpu.memory_space<vmem>>, vector<1x16x225xbf16>
    %346 = vector.shape_cast %345 : vector<1x16x225xbf16> to vector<16x225xbf16>
    %347 = arith.extf %346 : vector<16x225xbf16> to vector<16x225xf32>
    %348 = vector.broadcast %8 : f32 to vector<16x225xf32>
    %349 = arith.mulf %347, %348 : vector<16x225xf32>
    %350 = arith.addf %340, %349 : vector<16x225xf32>
    %351 = vector.broadcast %20 : f32 to vector<16x225xf32>
    %352 = arith.mulf %347, %351 : vector<16x225xf32>
    %353 = arith.addf %343, %352 : vector<16x225xf32>
    %c22_67 = arith.constant 22 : index
    %354 = arith.index_cast %27 : i32 to index
    %c0_68 = arith.constant 0 : index
    %355 = vector.load %arg1[%c22_67, %354, %c0_68] : memref<27x16x225xbf16, #tpu.memory_space<vmem>>, vector<1x16x225xbf16>
    %356 = vector.shape_cast %355 : vector<1x16x225xbf16> to vector<16x225xbf16>
    %357 = arith.extf %356 : vector<16x225xbf16> to vector<16x225xf32>
    %358 = vector.broadcast %9 : f32 to vector<16x225xf32>
    %359 = arith.mulf %357, %358 : vector<16x225xf32>
    %360 = arith.addf %350, %359 : vector<16x225xf32>
    %361 = vector.broadcast %21 : f32 to vector<16x225xf32>
    %362 = arith.mulf %357, %361 : vector<16x225xf32>
    %363 = arith.addf %353, %362 : vector<16x225xf32>
    %c24 = arith.constant 24 : index
    %364 = arith.index_cast %27 : i32 to index
    %c0_69 = arith.constant 0 : index
    %365 = vector.load %arg1[%c24, %364, %c0_69] : memref<27x16x225xbf16, #tpu.memory_space<vmem>>, vector<1x16x225xbf16>
    %366 = vector.shape_cast %365 : vector<1x16x225xbf16> to vector<16x225xbf16>
    %367 = arith.extf %366 : vector<16x225xbf16> to vector<16x225xf32>
    %368 = vector.broadcast %10 : f32 to vector<16x225xf32>
    %369 = arith.mulf %367, %368 : vector<16x225xf32>
    %370 = arith.addf %360, %369 : vector<16x225xf32>
    %371 = vector.broadcast %22 : f32 to vector<16x225xf32>
    %372 = arith.mulf %367, %371 : vector<16x225xf32>
    %373 = arith.addf %363, %372 : vector<16x225xf32>
    %c25 = arith.constant 25 : index
    %374 = arith.index_cast %27 : i32 to index
    %c0_70 = arith.constant 0 : index
    %375 = vector.load %arg1[%c25, %374, %c0_70] : memref<27x16x225xbf16, #tpu.memory_space<vmem>>, vector<1x16x225xbf16>
    %376 = vector.shape_cast %375 : vector<1x16x225xbf16> to vector<16x225xbf16>
    %377 = arith.extf %376 : vector<16x225xbf16> to vector<16x225xf32>
    %378 = vector.broadcast %11 : f32 to vector<16x225xf32>
    %379 = arith.mulf %377, %378 : vector<16x225xf32>
    %380 = arith.addf %370, %379 : vector<16x225xf32>
    %381 = vector.broadcast %23 : f32 to vector<16x225xf32>
    %382 = arith.mulf %377, %381 : vector<16x225xf32>
    %383 = arith.addf %373, %382 : vector<16x225xf32>
    %384 = arith.maximumf %264, %380 : vector<16x225xf32>
    %385 = arith.maximumf %265, %383 : vector<16x225xf32>
    %c4_71 = arith.constant 4 : index
    %386 = arith.index_cast %27 : i32 to index
    %c0_72 = arith.constant 0 : index
    %387 = vector.load %arg1[%c4_71, %386, %c0_72] : memref<27x16x225xbf16, #tpu.memory_space<vmem>>, vector<1x16x225xbf16>
    %388 = vector.shape_cast %387 : vector<1x16x225xbf16> to vector<16x225xbf16>
    %389 = arith.extf %388 : vector<16x225xbf16> to vector<16x225xf32>
    %390 = vector.broadcast %0 : f32 to vector<16x225xf32>
    %391 = arith.mulf %389, %390 : vector<16x225xf32>
    %392 = vector.broadcast %12 : f32 to vector<16x225xf32>
    %393 = arith.mulf %389, %392 : vector<16x225xf32>
    %c5_73 = arith.constant 5 : index
    %394 = arith.index_cast %27 : i32 to index
    %c0_74 = arith.constant 0 : index
    %395 = vector.load %arg1[%c5_73, %394, %c0_74] : memref<27x16x225xbf16, #tpu.memory_space<vmem>>, vector<1x16x225xbf16>
    %396 = vector.shape_cast %395 : vector<1x16x225xbf16> to vector<16x225xbf16>
    %397 = arith.extf %396 : vector<16x225xbf16> to vector<16x225xf32>
    %398 = vector.broadcast %1 : f32 to vector<16x225xf32>
    %399 = arith.mulf %397, %398 : vector<16x225xf32>
    %400 = arith.addf %391, %399 : vector<16x225xf32>
    %401 = vector.broadcast %13 : f32 to vector<16x225xf32>
    %402 = arith.mulf %397, %401 : vector<16x225xf32>
    %403 = arith.addf %393, %402 : vector<16x225xf32>
    %c7_75 = arith.constant 7 : index
    %404 = arith.index_cast %27 : i32 to index
    %c0_76 = arith.constant 0 : index
    %405 = vector.load %arg1[%c7_75, %404, %c0_76] : memref<27x16x225xbf16, #tpu.memory_space<vmem>>, vector<1x16x225xbf16>
    %406 = vector.shape_cast %405 : vector<1x16x225xbf16> to vector<16x225xbf16>
    %407 = arith.extf %406 : vector<16x225xbf16> to vector<16x225xf32>
    %408 = vector.broadcast %2 : f32 to vector<16x225xf32>
    %409 = arith.mulf %407, %408 : vector<16x225xf32>
    %410 = arith.addf %400, %409 : vector<16x225xf32>
    %411 = vector.broadcast %14 : f32 to vector<16x225xf32>
    %412 = arith.mulf %407, %411 : vector<16x225xf32>
    %413 = arith.addf %403, %412 : vector<16x225xf32>
    %c8_77 = arith.constant 8 : index
    %414 = arith.index_cast %27 : i32 to index
    %c0_78 = arith.constant 0 : index
    %415 = vector.load %arg1[%c8_77, %414, %c0_78] : memref<27x16x225xbf16, #tpu.memory_space<vmem>>, vector<1x16x225xbf16>
    %416 = vector.shape_cast %415 : vector<1x16x225xbf16> to vector<16x225xbf16>
    %417 = arith.extf %416 : vector<16x225xbf16> to vector<16x225xf32>
    %418 = vector.broadcast %3 : f32 to vector<16x225xf32>
    %419 = arith.mulf %417, %418 : vector<16x225xf32>
    %420 = arith.addf %410, %419 : vector<16x225xf32>
    %421 = vector.broadcast %15 : f32 to vector<16x225xf32>
    %422 = arith.mulf %417, %421 : vector<16x225xf32>
    %423 = arith.addf %413, %422 : vector<16x225xf32>
    %c13_79 = arith.constant 13 : index
    %424 = arith.index_cast %27 : i32 to index
    %c0_80 = arith.constant 0 : index
    %425 = vector.load %arg1[%c13_79, %424, %c0_80] : memref<27x16x225xbf16, #tpu.memory_space<vmem>>, vector<1x16x225xbf16>
    %426 = vector.shape_cast %425 : vector<1x16x225xbf16> to vector<16x225xbf16>
    %427 = arith.extf %426 : vector<16x225xbf16> to vector<16x225xf32>
    %428 = vector.broadcast %4 : f32 to vector<16x225xf32>
    %429 = arith.mulf %427, %428 : vector<16x225xf32>
    %430 = arith.addf %420, %429 : vector<16x225xf32>
    %431 = vector.broadcast %16 : f32 to vector<16x225xf32>
    %432 = arith.mulf %427, %431 : vector<16x225xf32>
    %433 = arith.addf %423, %432 : vector<16x225xf32>
    %c14_81 = arith.constant 14 : index
    %434 = arith.index_cast %27 : i32 to index
    %c0_82 = arith.constant 0 : index
    %435 = vector.load %arg1[%c14_81, %434, %c0_82] : memref<27x16x225xbf16, #tpu.memory_space<vmem>>, vector<1x16x225xbf16>
    %436 = vector.shape_cast %435 : vector<1x16x225xbf16> to vector<16x225xbf16>
    %437 = arith.extf %436 : vector<16x225xbf16> to vector<16x225xf32>
    %438 = vector.broadcast %5 : f32 to vector<16x225xf32>
    %439 = arith.mulf %437, %438 : vector<16x225xf32>
    %440 = arith.addf %430, %439 : vector<16x225xf32>
    %441 = vector.broadcast %17 : f32 to vector<16x225xf32>
    %442 = arith.mulf %437, %441 : vector<16x225xf32>
    %443 = arith.addf %433, %442 : vector<16x225xf32>
    %c16_83 = arith.constant 16 : index
    %444 = arith.index_cast %27 : i32 to index
    %c0_84 = arith.constant 0 : index
    %445 = vector.load %arg1[%c16_83, %444, %c0_84] : memref<27x16x225xbf16, #tpu.memory_space<vmem>>, vector<1x16x225xbf16>
    %446 = vector.shape_cast %445 : vector<1x16x225xbf16> to vector<16x225xbf16>
    %447 = arith.extf %446 : vector<16x225xbf16> to vector<16x225xf32>
    %448 = vector.broadcast %6 : f32 to vector<16x225xf32>
    %449 = arith.mulf %447, %448 : vector<16x225xf32>
    %450 = arith.addf %440, %449 : vector<16x225xf32>
    %451 = vector.broadcast %18 : f32 to vector<16x225xf32>
    %452 = arith.mulf %447, %451 : vector<16x225xf32>
    %453 = arith.addf %443, %452 : vector<16x225xf32>
    %c17_85 = arith.constant 17 : index
    %454 = arith.index_cast %27 : i32 to index
    %c0_86 = arith.constant 0 : index
    %455 = vector.load %arg1[%c17_85, %454, %c0_86] : memref<27x16x225xbf16, #tpu.memory_space<vmem>>, vector<1x16x225xbf16>
    %456 = vector.shape_cast %455 : vector<1x16x225xbf16> to vector<16x225xbf16>
    %457 = arith.extf %456 : vector<16x225xbf16> to vector<16x225xf32>
    %458 = vector.broadcast %7 : f32 to vector<16x225xf32>
    %459 = arith.mulf %457, %458 : vector<16x225xf32>
    %460 = arith.addf %450, %459 : vector<16x225xf32>
    %461 = vector.broadcast %19 : f32 to vector<16x225xf32>
    %462 = arith.mulf %457, %461 : vector<16x225xf32>
    %463 = arith.addf %453, %462 : vector<16x225xf32>
    %c22_87 = arith.constant 22 : index
    %464 = arith.index_cast %27 : i32 to index
    %c0_88 = arith.constant 0 : index
    %465 = vector.load %arg1[%c22_87, %464, %c0_88] : memref<27x16x225xbf16, #tpu.memory_space<vmem>>, vector<1x16x225xbf16>
    %466 = vector.shape_cast %465 : vector<1x16x225xbf16> to vector<16x225xbf16>
    %467 = arith.extf %466 : vector<16x225xbf16> to vector<16x225xf32>
    %468 = vector.broadcast %8 : f32 to vector<16x225xf32>
    %469 = arith.mulf %467, %468 : vector<16x225xf32>
    %470 = arith.addf %460, %469 : vector<16x225xf32>
    %471 = vector.broadcast %20 : f32 to vector<16x225xf32>
    %472 = arith.mulf %467, %471 : vector<16x225xf32>
    %473 = arith.addf %463, %472 : vector<16x225xf32>
    %c23_89 = arith.constant 23 : index
    %474 = arith.index_cast %27 : i32 to index
    %c0_90 = arith.constant 0 : index
    %475 = vector.load %arg1[%c23_89, %474, %c0_90] : memref<27x16x225xbf16, #tpu.memory_space<vmem>>, vector<1x16x225xbf16>
    %476 = vector.shape_cast %475 : vector<1x16x225xbf16> to vector<16x225xbf16>
    %477 = arith.extf %476 : vector<16x225xbf16> to vector<16x225xf32>
    %478 = vector.broadcast %9 : f32 to vector<16x225xf32>
    %479 = arith.mulf %477, %478 : vector<16x225xf32>
    %480 = arith.addf %470, %479 : vector<16x225xf32>
    %481 = vector.broadcast %21 : f32 to vector<16x225xf32>
    %482 = arith.mulf %477, %481 : vector<16x225xf32>
    %483 = arith.addf %473, %482 : vector<16x225xf32>
    %c25_91 = arith.constant 25 : index
    %484 = arith.index_cast %27 : i32 to index
    %c0_92 = arith.constant 0 : index
    %485 = vector.load %arg1[%c25_91, %484, %c0_92] : memref<27x16x225xbf16, #tpu.memory_space<vmem>>, vector<1x16x225xbf16>
    %486 = vector.shape_cast %485 : vector<1x16x225xbf16> to vector<16x225xbf16>
    %487 = arith.extf %486 : vector<16x225xbf16> to vector<16x225xf32>
    %488 = vector.broadcast %10 : f32 to vector<16x225xf32>
    %489 = arith.mulf %487, %488 : vector<16x225xf32>
    %490 = arith.addf %480, %489 : vector<16x225xf32>
    %491 = vector.broadcast %22 : f32 to vector<16x225xf32>
    %492 = arith.mulf %487, %491 : vector<16x225xf32>
    %493 = arith.addf %483, %492 : vector<16x225xf32>
    %c26 = arith.constant 26 : index
    %494 = arith.index_cast %27 : i32 to index
    %c0_93 = arith.constant 0 : index
    %495 = vector.load %arg1[%c26, %494, %c0_93] : memref<27x16x225xbf16, #tpu.memory_space<vmem>>, vector<1x16x225xbf16>
    %496 = vector.shape_cast %495 : vector<1x16x225xbf16> to vector<16x225xbf16>
    %497 = arith.extf %496 : vector<16x225xbf16> to vector<16x225xf32>
    %498 = vector.broadcast %11 : f32 to vector<16x225xf32>
    %499 = arith.mulf %497, %498 : vector<16x225xf32>
    %500 = arith.addf %490, %499 : vector<16x225xf32>
    %501 = vector.broadcast %23 : f32 to vector<16x225xf32>
    %502 = arith.mulf %497, %501 : vector<16x225xf32>
    %503 = arith.addf %493, %502 : vector<16x225xf32>
    %504 = arith.maximumf %384, %500 : vector<16x225xf32>
    %505 = arith.maximumf %385, %503 : vector<16x225xf32>
    %c0_94 = arith.constant 0 : index
    %506 = arith.index_cast %27 : i32 to index
    %c0_95 = arith.constant 0 : index
    %507 = vector.load %arg6[%c0_94, %506, %c0_95] : memref<2x16x225xf32, #tpu.memory_space<vmem>>, vector<1x16x225xf32>
    %508 = vector.shape_cast %507 : vector<1x16x225xf32> to vector<16x225xf32>
    %509 = vector.shape_cast %504 : vector<16x225xf32> to vector<1x16x225xf32>
    tpu.vector_store %arg6[%c0_94, %506, %c0_95], %509 {strides = array<i32>} : memref<2x16x225xf32, #tpu.memory_space<vmem>>, vector<1x16x225xf32>,
    %c1_96 = arith.constant 1 : index
    %510 = arith.index_cast %27 : i32 to index
    %c0_97 = arith.constant 0 : index
    %511 = vector.load %arg6[%c1_96, %510, %c0_97] : memref<2x16x225xf32, #tpu.memory_space<vmem>>, vector<1x16x225xf32>
    %512 = vector.shape_cast %511 : vector<1x16x225xf32> to vector<16x225xf32>
    %513 = vector.shape_cast %505 : vector<16x225xf32> to vector<1x16x225xf32>
    tpu.vector_store %arg6[%c1_96, %510, %c0_97], %513 {strides = array<i32>} : memref<2x16x225xf32, #tpu.memory_space<vmem>>, vector<1x16x225xf32>,
    %c1_i32_98 = arith.constant 1 : i32
    %c0_99 = arith.constant 0 : index
    %c0_100 = arith.constant 0 : index
    %514 = vector.load %arg4[%c0_99, %c0_100] : memref<1x128xf32, #tpu.memory_space<vmem>>, vector<1x128xf32>
    %c0_101 = arith.constant 0 : index
    %c0_102 = arith.constant 0 : index
    %c0_103 = arith.constant 0 : index
    %515 = vector.load %arg6[%c0_101, %c0_102, %c0_103] : memref<2x16x225xf32, #tpu.memory_space<vmem>>, vector<1x16x225xf32>
    %516 = vector.shape_cast %515 : vector<1x16x225xf32> to vector<16x225xf32>
    %c0_104 = arith.constant 0 : index
    %c0_105 = arith.constant 0 : index
    %c0_106 = arith.constant 0 : index
    %517 = vector.load %arg3[%c0_104, %c0_105, %c0_106] : memref<2x225x128xf32, #tpu.memory_space<vmem>>, vector<1x225x128xf32>
    %518 = vector.shape_cast %517 : vector<1x225x128xf32> to vector<225x128xf32>
    %cst = arith.constant dense<0.000000e+00> : vector<16x128xf32>
    %519 = tpu.matmul %516, %518, %cst {dimension_numbers = #tpu.dot_dimension_numbers<[1], [0], [0], [1], [0, 0, 1, 1], [], []>} : vector<16x225xf32>, vector<225x128xf32>, vector<16x128xf32> -> vector<16x128xf32>
    %520 = vector.broadcast %514 : vector<1x128xf32> to vector<16x128xf32>
    %521 = arith.addf %520, %519 : vector<16x128xf32>
    %c1_107 = arith.constant 1 : index
    %c0_108 = arith.constant 0 : index
    %c0_109 = arith.constant 0 : index
    %522 = vector.load %arg6[%c1_107, %c0_108, %c0_109] : memref<2x16x225xf32, #tpu.memory_space<vmem>>, vector<1x16x225xf32>
    %523 = vector.shape_cast %522 : vector<1x16x225xf32> to vector<16x225xf32>
    %c1_110 = arith.constant 1 : index
    %c0_111 = arith.constant 0 : index
    %c0_112 = arith.constant 0 : index
    %524 = vector.load %arg3[%c1_110, %c0_111, %c0_112] : memref<2x225x128xf32, #tpu.memory_space<vmem>>, vector<1x225x128xf32>
    %525 = vector.shape_cast %524 : vector<1x225x128xf32> to vector<225x128xf32>
    %cst_113 = arith.constant dense<0.000000e+00> : vector<16x128xf32>
    %526 = tpu.matmul %523, %525, %cst_113 {dimension_numbers = #tpu.dot_dimension_numbers<[1], [0], [0], [1], [0, 0, 1, 1], [], []>} : vector<16x225xf32>, vector<225x128xf32>, vector<16x128xf32> -> vector<16x128xf32>
    %527 = arith.addf %521, %526 : vector<16x128xf32>
    %c0_114 = arith.constant 0 : index
    %c0_115 = arith.constant 0 : index
    %528 = vector.load %arg5[%c0_114, %c0_115] : memref<16x128xf32, #tpu.memory_space<vmem>>, vector<16x128xf32>
    tpu.vector_store %arg5[%c0_114, %c0_115], %527 {strides = array<i32>} : memref<16x128xf32, #tpu.memory_space<vmem>>, vector<16x128xf32>,
    return
  }
  func.func @transform_0(%arg0: i32) -> (i32, i32, i32) {
    %c0_i32 = arith.constant 0 : i32
    %c0_i32_0 = arith.constant 0 : i32
    %c0_i32_1 = arith.constant 0 : i32
    return %c0_i32, %arg0, %c0_i32_0 : i32, i32, i32
  }
  func.func @transform_1(%arg0: i32) -> i32 {
    %c0_i32 = arith.constant 0 : i32
    %c0_i32_0 = arith.constant 0 : i32
    return %c0_i32 : i32
  }
  func.func @transform_2(%arg0: i32) -> (i32, i32, i32) {
    %c0_i32 = arith.constant 0 : i32
    %c0_i32_0 = arith.constant 0 : i32
    %c0_i32_1 = arith.constant 0 : i32
    %c0_i32_2 = arith.constant 0 : i32
    return %c0_i32, %c0_i32_0, %c0_i32_1 : i32, i32, i32
  }
  func.func @transform_3(%arg0: i32) -> (i32, i32) {
    %c0_i32 = arith.constant 0 : i32
    %c0_i32_0 = arith.constant 0 : i32
    %c0_i32_1 = arith.constant 0 : i32
    return %c0_i32, %c0_i32_0 : i32, i32
  }
  func.func @transform_4(%arg0: i32) -> (i32, i32) {
    %c0_i32 = arith.constant 0 : i32
    %c0_i32_0 = arith.constant 0 : i32
    return %arg0, %c0_i32 : i32, i32
  }
}

</mosaic_0001>

<llo_original>
// kernel: tpu_custom_call.1
$region0: #{tpu_custom_call.1}
  #allocation0 [shape = 'u32[]', space=smem, size = 0x4, offset = 0x4, fixed_abs, tag = 'smem constant byte address 0x4 - core index']
  #allocation1 [shape = 'u32[144,128]{1,0:T(1,128)}', space=vmem, size = 0x12000, scoped, tag = 'internal scratch']
  #allocation2 [shape = 'f32[2,16,225]{2,1,0:T(8,128)}', space=vmem, size = 0x8000, scoped, tag = 'scratch operand']
  %s0 = inlined_call_operand.vmem [shape: bf16[27,16,225], index: 0, kind: input, shape index: {}]
  %s1 = inlined_call_operand.vmem [shape: f32[24], index: 1, kind: input, shape index: {}]
  %s2 = inlined_call_operand.vmem [shape: f32[2,225,128], index: 2, kind: input, shape index: {}]
  %s3 = inlined_call_operand.vmem [shape: f32[1,128], index: 3, kind: input, shape index: {}]
  %s4 = inlined_call_operand.hbm [shape: f32[16,128], index: 4, kind: output, shape index: {}]
  %s5 = sld [smem:[#allocation0]]
  $region30: #{tpu_custom_call.1} parent=0
    _
  %s7 = ssub.s32 1, %s5
  %s8 = scalar_select 0, %s7, %s5
  $region1: #{tpu_custom_call.1} parent=0
    #allocation3 [shape = 'u8[512]{0}', space=smem, size = 0x200, scoped, tag = 'input window, operand 1, single buffered']
    #allocation4 [shape = 's32[1]{0}', space=sflag, size = 0x4, scoped, tag = 'scoped memory for tpu_custom_call.1']
    #allocation5 [shape = 's32[1]{0}', space=sflag, size = 0x4, scoped, tag = 'scoped memory for tpu_custom_call.1']
    #allocation6 [shape = 'u8[8192]{0}', space=vmem, size = 0x2000, scoped, tag = 'output window, operand 0, single buffered']
    %9 = vsyncpa [#allocation5], 0
    %10 = vsyncpa [#allocation4], 0
    // Predicated region
    $region2: #{tpu_custom_call.1} parent=1 // pred_check
      _
    $region3: #{tpu_custom_call.1} parent=1 // pred_check_branch
      %12 = sbr.rel (0) target = $region5
    $region4: #{tpu_custom_call.1} parent=1 // pred_region
      _
    $region5: #{tpu_custom_call.1} parent=1 // pred_fallthru
      _
    // Predicated region
    $region6: #{tpu_custom_call.1} parent=1 // pred_check
      _
    $region7: #{tpu_custom_call.1} parent=1 // pred_check_branch
      %14 = sbr.rel (0) target = $region9
    $region8: #{tpu_custom_call.1} parent=1 // pred_region
      %s16 = ssub.s32 16, 16
      %17 = vsyncadd [#allocation5], %s16
      %s19 = sshll.u32 %s1, 4
      %s20 = int_to_ptr.vmem [resolvable:$true] %s19
      %22 = dma.vmem_to_smem %s20, 16, [#allocation3], [#allocation5]
    $region9: #{tpu_custom_call.1} parent=1 // pred_fallthru
      _
    // Predicated region
    $region10: #{tpu_custom_call.1} parent=1 // pred_check
      _
    $region11: #{tpu_custom_call.1} parent=1 // pred_check_branch
      %24 = sbr.rel (0) target = $region13
    $region12: #{tpu_custom_call.1} parent=1 // pred_region
      _
    $region13: #{tpu_custom_call.1} parent=1 // pred_fallthru
      _
    // Predicated region
    $region14: #{tpu_custom_call.1} parent=1 // pred_check
      _
    $region15: #{tpu_custom_call.1} parent=1 // pred_check_branch
      %26 = sbr.rel (0) target = $region17
    $region16: #{tpu_custom_call.1} parent=1 // pred_region
      _
    $region17: #{tpu_custom_call.1} parent=1 // pred_fallthru
      _
    // Predicated region
    $region18: #{tpu_custom_call.1} parent=1 // pred_check
      _
    $region19: #{tpu_custom_call.1} parent=1 // pred_check_branch
      %28 = sbr.rel (0) target = $region21
    $region20: #{tpu_custom_call.1} parent=1 // pred_region
      %29 = dma.done [#allocation5], 16
    $region21: #{tpu_custom_call.1} parent=1 // pred_fallthru
      _
    %30 = sfence
    %s31 = sld [smem:[#allocation3]]
    %s32 = sld [smem:[#allocation3 + $0x1]]
    %s33 = sld [smem:[#allocation3 + $0x2]]
    %s34 = sld [smem:[#allocation3 + $0x3]]
    %s35 = sld [smem:[#allocation3 + $0x4]]
    %s36 = sld [smem:[#allocation3 + $0x5]]
    %s37 = sld [smem:[#allocation3 + $0x6]]
    %s38 = sld [smem:[#allocation3 + $0x7]]
    %s39 = sld [smem:[#allocation3 + $0x8]]
    %s40 = sld [smem:[#allocation3 + $0x9]]
    %s41 = sld [smem:[#allocation3 + $0xa]]
    %s42 = sld [smem:[#allocation3 + $0xb]]
    %s43 = sld [smem:[#allocation3 + $0xc]]
    %s44 = sld [smem:[#allocation3 + $0xd]]
    %s45 = sld [smem:[#allocation3 + $0xe]]
    %s46 = sld [smem:[#allocation3 + $0xf]]
    %s47 = sld [smem:[#allocation3 + $0x10]]
    %s48 = sld [smem:[#allocation3 + $0x11]]
    %s49 = sld [smem:[#allocation3 + $0x12]]
    %s50 = sld [smem:[#allocation3 + $0x13]]
    %s51 = sld [smem:[#allocation3 + $0x14]]
    %s52 = sld [smem:[#allocation3 + $0x15]]
    %s53 = sld [smem:[#allocation3 + $0x16]]
    %s54 = sld [smem:[#allocation3 + $0x17]]
    %s55 = smul.u32 0, 2
    %s56 = smul.addr %s55, 4
    %s57 = scalar_lea.vmem %s0, %s56
    %v58 = vld [vmem:[%s57] sm:$0xff]
    %v59 = vld [vmem:[%s57 + $0x8] sm:$0xff]
    %v60 = vunpack.c.l.bf16 %v58
    %v61 = vunpack.c.h.bf16 %v58
    %v62 = vunpack.c.l.bf16 %v59
    %v63 = vunpack.c.h.bf16 %v59
    %v64 = vstv %s31
    %v65 = vmul.f32 %v60, %v64
    %v66 = vmul.f32 %v61, %v64
    %v67 = vmul.f32 %v62, %v64
    %v68 = vmul.f32 %v63, %v64
    %v69 = vstv %s43
    %v70 = vmul.f32 %v60, %v69
    %v71 = vmul.f32 %v61, %v69
    %v72 = vmul.f32 %v62, %v69
    %v73 = vmul.f32 %v63, %v69
    %s74 = sadd.s32 %s55, 4
    %s75 = smul.addr %s74, 4
    %s76 = scalar_lea.vmem %s0, %s75
    %v77 = vld [vmem:[%s76] sm:$0xff]
    %v78 = vld [vmem:[%s76 + $0x8] sm:$0xff]
    %v79 = vunpack.c.l.bf16 %v77
    %v80 = vunpack.c.h.bf16 %v77
    %v81 = vunpack.c.l.bf16 %v78
    %v82 = vunpack.c.h.bf16 %v78
    %v83 = vstv %s32
    %v84 = vmul.f32 %v79, %v83
    %v85 = vmul.f32 %v80, %v83
    %v86 = vmul.f32 %v81, %v83
    %v87 = vmul.f32 %v82, %v83
    %v88 = vadd.f32 %v65, %v84
    %v89 = vadd.f32 %v66, %v85
    %v90 = vadd.f32 %v67, %v86
    %v91 = vadd.f32 %v68, %v87
    %v92 = vstv %s44
    %v93 = vmul.f32 %v79, %v92
    %v94 = vmul.f32 %v80, %v92
    %v95 = vmul.f32 %v81, %v92
    %v96 = vmul.f32 %v82, %v92
    %v97 = vadd.f32 %v70, %v93
    %v98 = vadd.f32 %v71, %v94
    %v99 = vadd.f32 %v72, %v95
    %v100 = vadd.f32 %v73, %v96
    %s101 = sadd.s32 %s55, 12
    %s102 = smul.addr %s101, 4
    %s103 = scalar_lea.vmem %s0, %s102
    %v104 = vld [vmem:[%s103] sm:$0xff]
    %v105 = vld [vmem:[%s103 + $0x8] sm:$0xff]
    %v106 = vunpack.c.l.bf16 %v104
    %v107 = vunpack.c.h.bf16 %v104
    %v108 = vunpack.c.l.bf16 %v105
    %v109 = vunpack.c.h.bf16 %v105
    %v110 = vstv %s33
    %v111 = vmul.f32 %v106, %v110
    %v112 = vmul.f32 %v107, %v110
    %v113 = vmul.f32 %v108, %v110
    %v114 = vmul.f32 %v109, %v110
    %v115 = vadd.f32 %v88, %v111
    %v116 = vadd.f32 %v89, %v112
    %v117 = vadd.f32 %v90, %v113
    %v118 = vadd.f32 %v91, %v114
    %v119 = vstv %s45
    %v120 = vmul.f32 %v106, %v119
    %v121 = vmul.f32 %v107, %v119
    %v122 = vmul.f32 %v108, %v119
    %v123 = vmul.f32 %v109, %v119
    %v124 = vadd.f32 %v97, %v120
    %v125 = vadd.f32 %v98, %v121
    %v126 = vadd.f32 %v99, %v122
    %v127 = vadd.f32 %v100, %v123
    %s128 = sadd.s32 %s55, 16
    %s129 = smul.addr %s128, 4
    %s130 = scalar_lea.vmem %s0, %s129
    %v131 = vld [vmem:[%s130] sm:$0xff]
    %v132 = vld [vmem:[%s130 + $0x8] sm:$0xff]
    %v133 = vunpack.c.l.bf16 %v131
    %v134 = vunpack.c.h.bf16 %v131
    %v135 = vunpack.c.l.bf16 %v132
    %v136 = vunpack.c.h.bf16 %v132
    %v137 = vstv %s34
    %v138 = vmul.f32 %v133, %v137
    %v139 = vmul.f32 %v134, %v137
    %v140 = vmul.f32 %v135, %v137
    %v141 = vmul.f32 %v136, %v137
    %v142 = vadd.f32 %v115, %v138
    %v143 = vadd.f32 %v116, %v139
    %v144 = vadd.f32 %v117, %v140
    %v145 = vadd.f32 %v118, %v141
    %v146 = vstv %s46
    %v147 = vmul.f32 %v133, %v146
    %v148 = vmul.f32 %v134, %v146
    %v149 = vmul.f32 %v135, %v146
    %v150 = vmul.f32 %v136, %v146
    %v151 = vadd.f32 %v124, %v147
    %v152 = vadd.f32 %v125, %v148
    %v153 = vadd.f32 %v126, %v149
    %v154 = vadd.f32 %v127, %v150
    %s155 = sadd.s32 %s55, 36
    %s156 = smul.addr %s155, 4
    %s157 = scalar_lea.vmem %s0, %s156
    %v158 = vld [vmem:[%s157] sm:$0xff]
    %v159 = vld [vmem:[%s157 + $0x8] sm:$0xff]
    %v160 = vunpack.c.l.bf16 %v158
    %v161 = vunpack.c.h.bf16 %v158
    %v162 = vunpack.c.l.bf16 %v159
    %v163 = vunpack.c.h.bf16 %v159
    %v164 = vstv %s35
    %v165 = vmul.f32 %v160, %v164
    %v166 = vmul.f32 %v161, %v164
    %v167 = vmul.f32 %v162, %v164
    %v168 = vmul.f32 %v163, %v164
    %v169 = vadd.f32 %v142, %v165
    %v170 = vadd.f32 %v143, %v166
    %v171 = vadd.f32 %v144, %v167
    %v172 = vadd.f32 %v145, %v168
    %v173 = vstv %s47
    %v174 = vmul.f32 %v160, %v173
    %v175 = vmul.f32 %v161, %v173
    %v176 = vmul.f32 %v162, %v173
    %v177 = vmul.f32 %v163, %v173
    %v178 = vadd.f32 %v151, %v174
    %v179 = vadd.f32 %v152, %v175
    %v180 = vadd.f32 %v153, %v176
    %v181 = vadd.f32 %v154, %v177
    %s182 = sadd.s32 %s55, 40
    %s183 = smul.addr %s182, 4
    %s184 = scalar_lea.vmem %s0, %s183
    %v185 = vld [vmem:[%s184] sm:$0xff]
    %v186 = vld [vmem:[%s184 + $0x8] sm:$0xff]
    %v187 = vunpack.c.l.bf16 %v185
    %v188 = vunpack.c.h.bf16 %v185
    %v189 = vunpack.c.l.bf16 %v186
    %v190 = vunpack.c.h.bf16 %v186
    %v191 = vstv %s36
    %v192 = vmul.f32 %v187, %v191
    %v193 = vmul.f32 %v188, %v191
    %v194 = vmul.f32 %v189, %v191
    %v195 = vmul.f32 %v190, %v191
    %v196 = vadd.f32 %v169, %v192
    %v197 = vadd.f32 %v170, %v193
    %v198 = vadd.f32 %v171, %v194
    %v199 = vadd.f32 %v172, %v195
    %v200 = vstv %s48
    %v201 = vmul.f32 %v187, %v200
    %v202 = vmul.f32 %v188, %v200
    %v203 = vmul.f32 %v189, %v200
    %v204 = vmul.f32 %v190, %v200
    %v205 = vadd.f32 %v178, %v201
    %v206 = vadd.f32 %v179, %v202
    %v207 = vadd.f32 %v180, %v203
    %v208 = vadd.f32 %v181, %v204
    %s209 = sadd.s32 %s55, 48
    %s210 = smul.addr %s209, 4
    %s211 = scalar_lea.vmem %s0, %s210
    %v212 = vld [vmem:[%s211] sm:$0xff]
    %v213 = vld [vmem:[%s211 + $0x8] sm:$0xff]
    %v214 = vunpack.c.l.bf16 %v212
    %v215 = vunpack.c.h.bf16 %v212
    %v216 = vunpack.c.l.bf16 %v213
    %v217 = vunpack.c.h.bf16 %v213
    %v218 = vstv %s37
    %v219 = vmul.f32 %v214, %v218
    %v220 = vmul.f32 %v215, %v218
    %v221 = vmul.f32 %v216, %v218
    %v222 = vmul.f32 %v217, %v218
    %v223 = vadd.f32 %v196, %v219
    %v224 = vadd.f32 %v197, %v220
    %v225 = vadd.f32 %v198, %v221
    %v226 = vadd.f32 %v199, %v222
    %v227 = vstv %s49
    %v228 = vmul.f32 %v214, %v227
    %v229 = vmul.f32 %v215, %v227
    %v230 = vmul.f32 %v216, %v227
    %v231 = vmul.f32 %v217, %v227
    %v232 = vadd.f32 %v205, %v228
    %v233 = vadd.f32 %v206, %v229
    %v234 = vadd.f32 %v207, %v230
    %v235 = vadd.f32 %v208, %v231
    %s236 = sadd.s32 %s55, 52
    %s237 = smul.addr %s236, 4
    %s238 = scalar_lea.vmem %s0, %s237
    %v239 = vld [vmem:[%s238] sm:$0xff]
    %v240 = vld [vmem:[%s238 + $0x8] sm:$0xff]
    %v241 = vunpack.c.l.bf16 %v239
    %v242 = vunpack.c.h.bf16 %v239
    %v243 = vunpack.c.l.bf16 %v240
    %v244 = vunpack.c.h.bf16 %v240
    %v245 = vstv %s38
    %v246 = vmul.f32 %v241, %v245
    %v247 = vmul.f32 %v242, %v245
    %v248 = vmul.f32 %v243, %v245
    %v249 = vmul.f32 %v244, %v245
    %v250 = vadd.f32 %v223, %v246
    %v251 = vadd.f32 %v224, %v247
    %v252 = vadd.f32 %v225, %v248
    %v253 = vadd.f32 %v226, %v249
    %v254 = vstv %s50
    %v255 = vmul.f32 %v241, %v254
    %v256 = vmul.f32 %v242, %v254
    %v257 = vmul.f32 %v243, %v254
    %v258 = vmul.f32 %v244, %v254
    %v259 = vadd.f32 %v232, %v255
    %v260 = vadd.f32 %v233, %v256
    %v261 = vadd.f32 %v234, %v257
    %v262 = vadd.f32 %v235, %v258
    %s263 = sadd.s32 %s55, 72
    %s264 = smul.addr %s263, 4
    %s265 = scalar_lea.vmem %s0, %s264
    %v266 = vld [vmem:[%s265] sm:$0xff]
    %v267 = vld [vmem:[%s265 + $0x8] sm:$0xff]
    %v268 = vunpack.c.l.bf16 %v266
    %v269 = vunpack.c.h.bf16 %v266
    %v270 = vunpack.c.l.bf16 %v267
    %v271 = vunpack.c.h.bf16 %v267
    %v272 = vstv %s39
    %v273 = vmul.f32 %v268, %v272
    %v274 = vmul.f32 %v269, %v272
    %v275 = vmul.f32 %v270, %v272
    %v276 = vmul.f32 %v271, %v272
    %v277 = vadd.f32 %v250, %v273
    %v278 = vadd.f32 %v251, %v274
    %v279 = vadd.f32 %v252, %v275
    %v280 = vadd.f32 %v253, %v276
    %v281 = vstv %s51
    %v282 = vmul.f32 %v268, %v281
    %v283 = vmul.f32 %v269, %v281
    %v284 = vmul.f32 %v270, %v281
    %v285 = vmul.f32 %v271, %v281
    %v286 = vadd.f32 %v259, %v282
    %v287 = vadd.f32 %v260, %v283
    %v288 = vadd.f32 %v261, %v284
    %v289 = vadd.f32 %v262, %v285
    %s290 = sadd.s32 %s55, 76
    %s291 = smul.addr %s290, 4
    %s292 = scalar_lea.vmem %s0, %s291
    %v293 = vld [vmem:[%s292] sm:$0xff]
    %v294 = vld [vmem:[%s292 + $0x8] sm:$0xff]
    %v295 = vunpack.c.l.bf16 %v293
    %v296 = vunpack.c.h.bf16 %v293
    %v297 = vunpack.c.l.bf16 %v294
    %v298 = vunpack.c.h.bf16 %v294
    %v299 = vstv %s40
    %v300 = vmul.f32 %v295, %v299
    %v301 = vmul.f32 %v296, %v299
    %v302 = vmul.f32 %v297, %v299
    %v303 = vmul.f32 %v298, %v299
    %v304 = vadd.f32 %v277, %v300
    %v305 = vadd.f32 %v278, %v301
    %v306 = vadd.f32 %v279, %v302
    %v307 = vadd.f32 %v280, %v303
    %v308 = vstv %s52
    %v309 = vmul.f32 %v295, %v308
    %v310 = vmul.f32 %v296, %v308
    %v311 = vmul.f32 %v297, %v308
    %v312 = vmul.f32 %v298, %v308
    %v313 = vadd.f32 %v286, %v309
    %v314 = vadd.f32 %v287, %v310
    %v315 = vadd.f32 %v288, %v311
    %v316 = vadd.f32 %v289, %v312
    %s317 = sadd.s32 %s55, 84
    %s318 = smul.addr %s317, 4
    %s319 = scalar_lea.vmem %s0, %s318
    %v320 = vld [vmem:[%s319] sm:$0xff]
    %v321 = vld [vmem:[%s319 + $0x8] sm:$0xff]
    %v322 = vunpack.c.l.bf16 %v320
    %v323 = vunpack.c.h.bf16 %v320
    %v324 = vunpack.c.l.bf16 %v321
    %v325 = vunpack.c.h.bf16 %v321
    %v326 = vstv %s41
    %v327 = vmul.f32 %v322, %v326
    %v328 = vmul.f32 %v323, %v326
    %v329 = vmul.f32 %v324, %v326
    %v330 = vmul.f32 %v325, %v326
    %v331 = vadd.f32 %v304, %v327
    %v332 = vadd.f32 %v305, %v328
    %v333 = vadd.f32 %v306, %v329
    %v334 = vadd.f32 %v307, %v330
    %v335 = vstv %s53
    %v336 = vmul.f32 %v322, %v335
    %v337 = vmul.f32 %v323, %v335
    %v338 = vmul.f32 %v324, %v335
    %v339 = vmul.f32 %v325, %v335
    %v340 = vadd.f32 %v313, %v336
    %v341 = vadd.f32 %v314, %v337
    %v342 = vadd.f32 %v315, %v338
    %v343 = vadd.f32 %v316, %v339
    %s344 = sadd.s32 %s55, 88
    %s345 = smul.addr %s344, 4
    %s346 = scalar_lea.vmem %s0, %s345
    %v347 = vld [vmem:[%s346] sm:$0xff]
    %v348 = vld [vmem:[%s346 + $0x8] sm:$0xff]
    %v349 = vunpack.c.l.bf16 %v347
    %v350 = vunpack.c.h.bf16 %v347
    %v351 = vunpack.c.l.bf16 %v348
    %v352 = vunpack.c.h.bf16 %v348
    %v353 = vstv %s42
    %v354 = vmul.f32 %v349, %v353
    %v355 = vmul.f32 %v350, %v353
    %v356 = vmul.f32 %v351, %v353
    %v357 = vmul.f32 %v352, %v353
    %v358 = vadd.f32 %v331, %v354
    %v359 = vadd.f32 %v332, %v355
    %v360 = vadd.f32 %v333, %v356
    %v361 = vadd.f32 %v334, %v357
    %v362 = vstv %s54
    %v363 = vmul.f32 %v349, %v362
    %v364 = vmul.f32 %v350, %v362
    %v365 = vmul.f32 %v351, %v362
    %v366 = vmul.f32 %v352, %v362
    %v367 = vadd.f32 %v340, %v363
    %v368 = vadd.f32 %v341, %v364
    %v369 = vadd.f32 %v342, %v365
    %v370 = vadd.f32 %v343, %v366
    %v371 = vmul.f32 %v79, %v64
    %v372 = vmul.f32 %v80, %v64
    %v373 = vmul.f32 %v81, %v64
    %v374 = vmul.f32 %v82, %v64
    %v375 = vmul.f32 %v79, %v69
    %v376 = vmul.f32 %v80, %v69
    %v377 = vmul.f32 %v81, %v69
    %v378 = vmul.f32 %v82, %v69
    %s379 = sadd.s32 %s55, 8
    %s380 = smul.addr %s379, 4
    %s381 = scalar_lea.vmem %s0, %s380
    %v382 = vld [vmem:[%s381] sm:$0xff]
    %v383 = vld [vmem:[%s381 + $0x8] sm:$0xff]
    %v384 = vunpack.c.l.bf16 %v382
    %v385 = vunpack.c.h.bf16 %v382
    %v386 = vunpack.c.l.bf16 %v383
    %v387 = vunpack.c.h.bf16 %v383
    %v388 = vmul.f32 %v384, %v83
    %v389 = vmul.f32 %v385, %v83
    %v390 = vmul.f32 %v386, %v83
    %v391 = vmul.f32 %v387, %v83
    %v392 = vadd.f32 %v371, %v388
    %v393 = vadd.f32 %v372, %v389
    %v394 = vadd.f32 %v373, %v390
    %v395 = vadd.f32 %v374, %v391
    %v396 = vmul.f32 %v384, %v92
    %v397 = vmul.f32 %v385, %v92
    %v398 = vmul.f32 %v386, %v92
    %v399 = vmul.f32 %v387, %v92
    %v400 = vadd.f32 %v375, %v396
    %v401 = vadd.f32 %v376, %v397
    %v402 = vadd.f32 %v377, %v398
    %v403 = vadd.f32 %v378, %v399
    %v404 = vmul.f32 %v133, %v110
    %v405 = vmul.f32 %v134, %v110
    %v406 = vmul.f32 %v135, %v110
    %v407 = vmul.f32 %v136, %v110
    %v408 = vadd.f32 %v392, %v404
    %v409 = vadd.f32 %v393, %v405
    %v410 = vadd.f32 %v394, %v406
    %v411 = vadd.f32 %v395, %v407
    %v412 = vmul.f32 %v133, %v119
    %v413 = vmul.f32 %v134, %v119
    %v414 = vmul.f32 %v135, %v119
    %v415 = vmul.f32 %v136, %v119
    %v416 = vadd.f32 %v400, %v412
    %v417 = vadd.f32 %v401, %v413
    %v418 = vadd.f32 %v402, %v414
    %v419 = vadd.f32 %v403, %v415
    %s420 = sadd.s32 %s55, 20
    %s421 = smul.addr %s420, 4
    %s422 = scalar_lea.vmem %s0, %s421
    %v423 = vld [vmem:[%s422] sm:$0xff]
    %v424 = vld [vmem:[%s422 + $0x8] sm:$0xff]
    %v425 = vunpack.c.l.bf16 %v423
    %v426 = vunpack.c.h.bf16 %v423
    %v427 = vunpack.c.l.bf16 %v424
    %v428 = vunpack.c.h.bf16 %v424
    %v429 = vmul.f32 %v425, %v137
    %v430 = vmul.f32 %v426, %v137
    %v431 = vmul.f32 %v427, %v137
    %v432 = vmul.f32 %v428, %v137
    %v433 = vadd.f32 %v408, %v429
    %v434 = vadd.f32 %v409, %v430
    %v435 = vadd.f32 %v410, %v431
    %v436 = vadd.f32 %v411, %v432
    %v437 = vmul.f32 %v425, %v146
    %v438 = vmul.f32 %v426, %v146
    %v439 = vmul.f32 %v427, %v146
    %v440 = vmul.f32 %v428, %v146
    %v441 = vadd.f32 %v416, %v437
    %v442 = vadd.f32 %v417, %v438
    %v443 = vadd.f32 %v418, %v439
    %v444 = vadd.f32 %v419, %v440
    %v445 = vmul.f32 %v187, %v164
    %v446 = vmul.f32 %v188, %v164
    %v447 = vmul.f32 %v189, %v164
    %v448 = vmul.f32 %v190, %v164
    %v449 = vadd.f32 %v433, %v445
    %v450 = vadd.f32 %v434, %v446
    %v451 = vadd.f32 %v435, %v447
    %v452 = vadd.f32 %v436, %v448
    %v453 = vmul.f32 %v187, %v173
    %v454 = vmul.f32 %v188, %v173
    %v455 = vmul.f32 %v189, %v173
    %v456 = vmul.f32 %v190, %v173
    %v457 = vadd.f32 %v441, %v453
    %v458 = vadd.f32 %v442, %v454
    %v459 = vadd.f32 %v443, %v455
    %v460 = vadd.f32 %v444, %v456
    %s461 = sadd.s32 %s55, 44
    %s462 = smul.addr %s461, 4
    %s463 = scalar_lea.vmem %s0, %s462
    %v464 = vld [vmem:[%s463] sm:$0xff]
    %v465 = vld [vmem:[%s463 + $0x8] sm:$0xff]
    %v466 = vunpack.c.l.bf16 %v464
    %v467 = vunpack.c.h.bf16 %v464
    %v468 = vunpack.c.l.bf16 %v465
    %v469 = vunpack.c.h.bf16 %v465
    %v470 = vmul.f32 %v466, %v191
    %v471 = vmul.f32 %v467, %v191
    %v472 = vmul.f32 %v468, %v191
    %v473 = vmul.f32 %v469, %v191
    %v474 = vadd.f32 %v449, %v470
    %v475 = vadd.f32 %v450, %v471
    %v476 = vadd.f32 %v451, %v472
    %v477 = vadd.f32 %v452, %v473
    %v478 = vmul.f32 %v466, %v200
    %v479 = vmul.f32 %v467, %v200
    %v480 = vmul.f32 %v468, %v200
    %v481 = vmul.f32 %v469, %v200
    %v482 = vadd.f32 %v457, %v478
    %v483 = vadd.f32 %v458, %v479
    %v484 = vadd.f32 %v459, %v480
    %v485 = vadd.f32 %v460, %v481
    %v486 = vmul.f32 %v241, %v218
    %v487 = vmul.f32 %v242, %v218
    %v488 = vmul.f32 %v243, %v218
    %v489 = vmul.f32 %v244, %v218
    %v490 = vadd.f32 %v474, %v486
    %v491 = vadd.f32 %v475, %v487
    %v492 = vadd.f32 %v476, %v488
    %v493 = vadd.f32 %v477, %v489
    %v494 = vmul.f32 %v241, %v227
    %v495 = vmul.f32 %v242, %v227
    %v496 = vmul.f32 %v243, %v227
    %v497 = vmul.f32 %v244, %v227
    %v498 = vadd.f32 %v482, %v494
    %v499 = vadd.f32 %v483, %v495
    %v500 = vadd.f32 %v484, %v496
    %v501 = vadd.f32 %v485, %v497
    %s502 = sadd.s32 %s55, 56
    %s503 = smul.addr %s502, 4
    %s504 = scalar_lea.vmem %s0, %s503
    %v505 = vld [vmem:[%s504] sm:$0xff]
    %v506 = vld [vmem:[%s504 + $0x8] sm:$0xff]
    %v507 = vunpack.c.l.bf16 %v505
    %v508 = vunpack.c.h.bf16 %v505
    %v509 = vunpack.c.l.bf16 %v506
    %v510 = vunpack.c.h.bf16 %v506
    %v511 = vmul.f32 %v507, %v245
    %v512 = vmul.f32 %v508, %v245
    %v513 = vmul.f32 %v509, %v245
    %v514 = vmul.f32 %v510, %v245
    %v515 = vadd.f32 %v490, %v511
    %v516 = vadd.f32 %v491, %v512
    %v517 = vadd.f32 %v492, %v513
    %v518 = vadd.f32 %v493, %v514
    %v519 = vmul.f32 %v507, %v254
    %v520 = vmul.f32 %v508, %v254
    %v521 = vmul.f32 %v509, %v254
    %v522 = vmul.f32 %v510, %v254
    %v523 = vadd.f32 %v498, %v519
    %v524 = vadd.f32 %v499, %v520
    %v525 = vadd.f32 %v500, %v521
    %v526 = vadd.f32 %v501, %v522
    %v527 = vmul.f32 %v295, %v272
    %v528 = vmul.f32 %v296, %v272
    %v529 = vmul.f32 %v297, %v272
    %v530 = vmul.f32 %v298, %v272
    %v531 = vadd.f32 %v515, %v527
    %v532 = vadd.f32 %v516, %v528
    %v533 = vadd.f32 %v517, %v529
    %v534 = vadd.f32 %v518, %v530
    %v535 = vmul.f32 %v295, %v281
    %v536 = vmul.f32 %v296, %v281
    %v537 = vmul.f32 %v297, %v281
    %v538 = vmul.f32 %v298, %v281
    %v539 = vadd.f32 %v523, %v535
    %v540 = vadd.f32 %v524, %v536
    %v541 = vadd.f32 %v525, %v537
    %v542 = vadd.f32 %v526, %v538
    %s543 = sadd.s32 %s55, 80
    %s544 = smul.addr %s543, 4
    %s545 = scalar_lea.vmem %s0, %s544
    %v546 = vld [vmem:[%s545] sm:$0xff]
    %v547 = vld [vmem:[%s545 + $0x8] sm:$0xff]
    %v548 = vunpack.c.l.bf16 %v546
    %v549 = vunpack.c.h.bf16 %v546
    %v550 = vunpack.c.l.bf16 %v547
    %v551 = vunpack.c.h.bf16 %v547
    %v552 = vmul.f32 %v548, %v299
    %v553 = vmul.f32 %v549, %v299
    %v554 = vmul.f32 %v550, %v299
    %v555 = vmul.f32 %v551, %v299
    %v556 = vadd.f32 %v531, %v552
    %v557 = vadd.f32 %v532, %v553
    %v558 = vadd.f32 %v533, %v554
    %v559 = vadd.f32 %v534, %v555
    %v560 = vmul.f32 %v548, %v308
    %v561 = vmul.f32 %v549, %v308
    %v562 = vmul.f32 %v550, %v308
    %v563 = vmul.f32 %v551, %v308
    %v564 = vadd.f32 %v539, %v560
    %v565 = vadd.f32 %v540, %v561
    %v566 = vadd.f32 %v541, %v562
    %v567 = vadd.f32 %v542, %v563
    %v568 = vmul.f32 %v349, %v326
    %v569 = vmul.f32 %v350, %v326
    %v570 = vmul.f32 %v351, %v326
    %v571 = vmul.f32 %v352, %v326
    %v572 = vadd.f32 %v556, %v568
    %v573 = vadd.f32 %v557, %v569
    %v574 = vadd.f32 %v558, %v570
    %v575 = vadd.f32 %v559, %v571
    %v576 = vmul.f32 %v349, %v335
    %v577 = vmul.f32 %v350, %v335
    %v578 = vmul.f32 %v351, %v335
    %v579 = vmul.f32 %v352, %v335
    %v580 = vadd.f32 %v564, %v576
    %v581 = vadd.f32 %v565, %v577
    %v582 = vadd.f32 %v566, %v578
    %v583 = vadd.f32 %v567, %v579
    %s584 = sadd.s32 %s55, 92
    %s585 = smul.addr %s584, 4
    %s586 = scalar_lea.vmem %s0, %s585
    %v587 = vld [vmem:[%s586] sm:$0xff]
    %v588 = vld [vmem:[%s586 + $0x8] sm:$0xff]
    %v589 = vunpack.c.l.bf16 %v587
    %v590 = vunpack.c.h.bf16 %v587
    %v591 = vunpack.c.l.bf16 %v588
    %v592 = vunpack.c.h.bf16 %v588
    %v593 = vmul.f32 %v589, %v353
    %v594 = vmul.f32 %v590, %v353
    %v595 = vmul.f32 %v591, %v353
    %v596 = vmul.f32 %v592, %v353
    %v597 = vadd.f32 %v572, %v593
    %v598 = vadd.f32 %v573, %v594
    %v599 = vadd.f32 %v574, %v595
    %v600 = vadd.f32 %v575, %v596
    %v601 = vmul.f32 %v589, %v362
    %v602 = vmul.f32 %v590, %v362
    %v603 = vmul.f32 %v591, %v362
    %v604 = vmul.f32 %v592, %v362
    %v605 = vadd.f32 %v580, %v601
    %v606 = vadd.f32 %v581, %v602
    %v607 = vadd.f32 %v582, %v603
    %v608 = vadd.f32 %v583, %v604
    %v609 = vmax.f32 %v358, %v597
    %v610 = vmax.f32 %v359, %v598
    %v611 = vmax.f32 %v360, %v599
    %v612 = vmax.f32 %v361, %v600
    %v613 = vmax.f32 %v367, %v605
    %v614 = vmax.f32 %v368, %v606
    %v615 = vmax.f32 %v369, %v607
    %v616 = vmax.f32 %v370, %v608
    %v617 = vmul.f32 %v106, %v64
    %v618 = vmul.f32 %v107, %v64
    %v619 = vmul.f32 %v108, %v64
    %v620 = vmul.f32 %v109, %v64
    %v621 = vmul.f32 %v106, %v69
    %v622 = vmul.f32 %v107, %v69
    %v623 = vmul.f32 %v108, %v69
    %v624 = vmul.f32 %v109, %v69
    %v625 = vmul.f32 %v133, %v83
    %v626 = vmul.f32 %v134, %v83
    %v627 = vmul.f32 %v135, %v83
    %v628 = vmul.f32 %v136, %v83
    %v629 = vadd.f32 %v617, %v625
    %v630 = vadd.f32 %v618, %v626
    %v631 = vadd.f32 %v619, %v627
    %v632 = vadd.f32 %v620, %v628
    %v633 = vmul.f32 %v133, %v92
    %v634 = vmul.f32 %v134, %v92
    %v635 = vmul.f32 %v135, %v92
    %v636 = vmul.f32 %v136, %v92
    %v637 = vadd.f32 %v621, %v633
    %v638 = vadd.f32 %v622, %v634
    %v639 = vadd.f32 %v623, %v635
    %v640 = vadd.f32 %v624, %v636
    %s641 = sadd.s32 %s55, 24
    %s642 = smul.addr %s641, 4
    %s643 = scalar_lea.vmem %s0, %s642
    %v644 = vld [vmem:[%s643] sm:$0xff]
    %v645 = vld [vmem:[%s643 + $0x8] sm:$0xff]
    %v646 = vunpack.c.l.bf16 %v644
    %v647 = vunpack.c.h.bf16 %v644
    %v648 = vunpack.c.l.bf16 %v645
    %v649 = vunpack.c.h.bf16 %v645
    %v650 = vmul.f32 %v646, %v110
    %v651 = vmul.f32 %v647, %v110
    %v652 = vmul.f32 %v648, %v110
    %v653 = vmul.f32 %v649, %v110
    %v654 = vadd.f32 %v629, %v650
    %v655 = vadd.f32 %v630, %v651
    %v656 = vadd.f32 %v631, %v652
    %v657 = vadd.f32 %v632, %v653
    %v658 = vmul.f32 %v646, %v119
    %v659 = vmul.f32 %v647, %v119
    %v660 = vmul.f32 %v648, %v119
    %v661 = vmul.f32 %v649, %v119
    %v662 = vadd.f32 %v637, %v658
    %v663 = vadd.f32 %v638, %v659
    %v664 = vadd.f32 %v639, %v660
    %v665 = vadd.f32 %v640, %v661
    %s666 = sadd.s32 %s55, 28
    %s667 = smul.addr %s666, 4
    %s668 = scalar_lea.vmem %s0, %s667
    %v669 = vld [vmem:[%s668] sm:$0xff]
    %v670 = vld [vmem:[%s668 + $0x8] sm:$0xff]
    %v671 = vunpack.c.l.bf16 %v669
    %v672 = vunpack.c.h.bf16 %v669
    %v673 = vunpack.c.l.bf16 %v670
    %v674 = vunpack.c.h.bf16 %v670
    %v675 = vmul.f32 %v671, %v137
    %v676 = vmul.f32 %v672, %v137
    %v677 = vmul.f32 %v673, %v137
    %v678 = vmul.f32 %v674, %v137
    %v679 = vadd.f32 %v654, %v675
    %v680 = vadd.f32 %v655, %v676
    %v681 = vadd.f32 %v656, %v677
    %v682 = vadd.f32 %v657, %v678
    %v683 = vmul.f32 %v671, %v146
    %v684 = vmul.f32 %v672, %v146
    %v685 = vmul.f32 %v673, %v146
    %v686 = vmul.f32 %v674, %v146
    %v687 = vadd.f32 %v662, %v683
    %v688 = vadd.f32 %v663, %v684
    %v689 = vadd.f32 %v664, %v685
    %v690 = vadd.f32 %v665, %v686
    %v691 = vmul.f32 %v214, %v164
    %v692 = vmul.f32 %v215, %v164
    %v693 = vmul.f32 %v216, %v164
    %v694 = vmul.f32 %v217, %v164
    %v695 = vadd.f32 %v679, %v691
    %v696 = vadd.f32 %v680, %v692
    %v697 = vadd.f32 %v681, %v693
    %v698 = vadd.f32 %v682, %v694
    %v699 = vmul.f32 %v214, %v173
    %v700 = vmul.f32 %v215, %v173
    %v701 = vmul.f32 %v216, %v173
    %v702 = vmul.f32 %v217, %v173
    %v703 = vadd.f32 %v687, %v699
    %v704 = vadd.f32 %v688, %v700
    %v705 = vadd.f32 %v689, %v701
    %v706 = vadd.f32 %v690, %v702
    %v707 = vmul.f32 %v241, %v191
    %v708 = vmul.f32 %v242, %v191
    %v709 = vmul.f32 %v243, %v191
    %v710 = vmul.f32 %v244, %v191
    %v711 = vadd.f32 %v695, %v707
    %v712 = vadd.f32 %v696, %v708
    %v713 = vadd.f32 %v697, %v709
    %v714 = vadd.f32 %v698, %v710
    %v715 = vmul.f32 %v241, %v200
    %v716 = vmul.f32 %v242, %v200
    %v717 = vmul.f32 %v243, %v200
    %v718 = vmul.f32 %v244, %v200
    %v719 = vadd.f32 %v703, %v715
    %v720 = vadd.f32 %v704, %v716
    %v721 = vadd.f32 %v705, %v717
    %v722 = vadd.f32 %v706, %v718
    %s723 = sadd.s32 %s55, 60
    %s724 = smul.addr %s723, 4
    %s725 = scalar_lea.vmem %s0, %s724
    %v726 = vld [vmem:[%s725] sm:$0xff]
    %v727 = vld [vmem:[%s725 + $0x8] sm:$0xff]
    %v728 = vunpack.c.l.bf16 %v726
    %v729 = vunpack.c.h.bf16 %v726
    %v730 = vunpack.c.l.bf16 %v727
    %v731 = vunpack.c.h.bf16 %v727
    %v732 = vmul.f32 %v728, %v218
    %v733 = vmul.f32 %v729, %v218
    %v734 = vmul.f32 %v730, %v218
    %v735 = vmul.f32 %v731, %v218
    %v736 = vadd.f32 %v711, %v732
    %v737 = vadd.f32 %v712, %v733
    %v738 = vadd.f32 %v713, %v734
    %v739 = vadd.f32 %v714, %v735
    %v740 = vmul.f32 %v728, %v227
    %v741 = vmul.f32 %v729, %v227
    %v742 = vmul.f32 %v730, %v227
    %v743 = vmul.f32 %v731, %v227
    %v744 = vadd.f32 %v719, %v740
    %v745 = vadd.f32 %v720, %v741
    %v746 = vadd.f32 %v721, %v742
    %v747 = vadd.f32 %v722, %v743
    %s748 = sadd.s32 %s55, 64
    %s749 = smul.addr %s748, 4
    %s750 = scalar_lea.vmem %s0, %s749
    %v751 = vld [vmem:[%s750] sm:$0xff]
    %v752 = vld [vmem:[%s750 + $0x8] sm:$0xff]
    %v753 = vunpack.c.l.bf16 %v751
    %v754 = vunpack.c.h.bf16 %v751
    %v755 = vunpack.c.l.bf16 %v752
    %v756 = vunpack.c.h.bf16 %v752
    %v757 = vmul.f32 %v753, %v245
    %v758 = vmul.f32 %v754, %v245
    %v759 = vmul.f32 %v755, %v245
    %v760 = vmul.f32 %v756, %v245
    %v761 = vadd.f32 %v736, %v757
    %v762 = vadd.f32 %v737, %v758
    %v763 = vadd.f32 %v738, %v759
    %v764 = vadd.f32 %v739, %v760
    %v765 = vmul.f32 %v753, %v254
    %v766 = vmul.f32 %v754, %v254
    %v767 = vmul.f32 %v755, %v254
    %v768 = vmul.f32 %v756, %v254
    %v769 = vadd.f32 %v744, %v765
    %v770 = vadd.f32 %v745, %v766
    %v771 = vadd.f32 %v746, %v767
    %v772 = vadd.f32 %v747, %v768
    %v773 = vmul.f32 %v322, %v272
    %v774 = vmul.f32 %v323, %v272
    %v775 = vmul.f32 %v324, %v272
    %v776 = vmul.f32 %v325, %v272
    %v777 = vadd.f32 %v761, %v773
    %v778 = vadd.f32 %v762, %v774
    %v779 = vadd.f32 %v763, %v775
    %v780 = vadd.f32 %v764, %v776
    %v781 = vmul.f32 %v322, %v281
    %v782 = vmul.f32 %v323, %v281
    %v783 = vmul.f32 %v324, %v281
    %v784 = vmul.f32 %v325, %v281
    %v785 = vadd.f32 %v769, %v781
    %v786 = vadd.f32 %v770, %v782
    %v787 = vadd.f32 %v771, %v783
    %v788 = vadd.f32 %v772, %v784
    %v789 = vmul.f32 %v349, %v299
    %v790 = vmul.f32 %v350, %v299
    %v791 = vmul.f32 %v351, %v299
    %v792 = vmul.f32 %v352, %v299
    %v793 = vadd.f32 %v777, %v789
    %v794 = vadd.f32 %v778, %v790
    %v795 = vadd.f32 %v779, %v791
    %v796 = vadd.f32 %v780, %v792
    %v797 = vmul.f32 %v349, %v308
    %v798 = vmul.f32 %v350, %v308
    %v799 = vmul.f32 %v351, %v308
    %v800 = vmul.f32 %v352, %v308
    %v801 = vadd.f32 %v785, %v797
    %v802 = vadd.f32 %v786, %v798
    %v803 = vadd.f32 %v787, %v799
    %v804 = vadd.f32 %v788, %v800
    %s805 = sadd.s32 %s55, 96
    %s806 = smul.addr %s805, 4
    %s807 = scalar_lea.vmem %s0, %s806
    %v808 = vld [vmem:[%s807] sm:$0xff]
    %v809 = vld [vmem:[%s807 + $0x8] sm:$0xff]
    %v810 = vunpack.c.l.bf16 %v808
    %v811 = vunpack.c.h.bf16 %v808
    %v812 = vunpack.c.l.bf16 %v809
    %v813 = vunpack.c.h.bf16 %v809
    %v814 = vmul.f32 %v810, %v326
    %v815 = vmul.f32 %v811, %v326
    %v816 = vmul.f32 %v812, %v326
    %v817 = vmul.f32 %v813, %v326
    %v818 = vadd.f32 %v793, %v814
    %v819 = vadd.f32 %v794, %v815
    %v820 = vadd.f32 %v795, %v816
    %v821 = vadd.f32 %v796, %v817
    %v822 = vmul.f32 %v810, %v335
    %v823 = vmul.f32 %v811, %v335
    %v824 = vmul.f32 %v812, %v335
    %v825 = vmul.f32 %v813, %v335
    %v826 = vadd.f32 %v801, %v822
    %v827 = vadd.f32 %v802, %v823
    %v828 = vadd.f32 %v803, %v824
    %v829 = vadd.f32 %v804, %v825
    %s830 = sadd.s32 %s55, 100
    %s831 = smul.addr %s830, 4
    %s832 = scalar_lea.vmem %s0, %s831
    %v833 = vld [vmem:[%s832] sm:$0xff]
    %v834 = vld [vmem:[%s832 + $0x8] sm:$0xff]
    %v835 = vunpack.c.l.bf16 %v833
    %v836 = vunpack.c.h.bf16 %v833
    %v837 = vunpack.c.l.bf16 %v834
    %v838 = vunpack.c.h.bf16 %v834
    %v839 = vmul.f32 %v835, %v353
    %v840 = vmul.f32 %v836, %v353
    %v841 = vmul.f32 %v837, %v353
    %v842 = vmul.f32 %v838, %v353
    %v843 = vadd.f32 %v818, %v839
    %v844 = vadd.f32 %v819, %v840
    %v845 = vadd.f32 %v820, %v841
    %v846 = vadd.f32 %v821, %v842
    %v847 = vmul.f32 %v835, %v362
    %v848 = vmul.f32 %v836, %v362
    %v849 = vmul.f32 %v837, %v362
    %v850 = vmul.f32 %v838, %v362
    %v851 = vadd.f32 %v826, %v847
    %v852 = vadd.f32 %v827, %v848
    %v853 = vadd.f32 %v828, %v849
    %v854 = vadd.f32 %v829, %v850
    %v855 = vmax.f32 %v609, %v843
    %v856 = vmax.f32 %v610, %v844
    %v857 = vmax.f32 %v611, %v845
    %v858 = vmax.f32 %v612, %v846
    %v859 = vmax.f32 %v613, %v851
    %v860 = vmax.f32 %v614, %v852
    %v861 = vmax.f32 %v615, %v853
    %v862 = vmax.f32 %v616, %v854
    %v863 = vmul.f32 %v133, %v64
    %v864 = vmul.f32 %v134, %v64
    %v865 = vmul.f32 %v135, %v64
    %v866 = vmul.f32 %v136, %v64
    %v867 = vmul.f32 %v133, %v69
    %v868 = vmul.f32 %v134, %v69
    %v869 = vmul.f32 %v135, %v69
    %v870 = vmul.f32 %v136, %v69
    %v871 = vmul.f32 %v425, %v83
    %v872 = vmul.f32 %v426, %v83
    %v873 = vmul.f32 %v427, %v83
    %v874 = vmul.f32 %v428, %v83
    %v875 = vadd.f32 %v863, %v871
    %v876 = vadd.f32 %v864, %v872
    %v877 = vadd.f32 %v865, %v873
    %v878 = vadd.f32 %v866, %v874
    %v879 = vmul.f32 %v425, %v92
    %v880 = vmul.f32 %v426, %v92
    %v881 = vmul.f32 %v427, %v92
    %v882 = vmul.f32 %v428, %v92
    %v883 = vadd.f32 %v867, %v879
    %v884 = vadd.f32 %v868, %v880
    %v885 = vadd.f32 %v869, %v881
    %v886 = vadd.f32 %v870, %v882
    %v887 = vmul.f32 %v671, %v110
    %v888 = vmul.f32 %v672, %v110
    %v889 = vmul.f32 %v673, %v110
    %v890 = vmul.f32 %v674, %v110
    %v891 = vadd.f32 %v875, %v887
    %v892 = vadd.f32 %v876, %v888
    %v893 = vadd.f32 %v877, %v889
    %v894 = vadd.f32 %v878, %v890
    %v895 = vmul.f32 %v671, %v119
    %v896 = vmul.f32 %v672, %v119
    %v897 = vmul.f32 %v673, %v119
    %v898 = vmul.f32 %v674, %v119
    %v899 = vadd.f32 %v883, %v895
    %v900 = vadd.f32 %v884, %v896
    %v901 = vadd.f32 %v885, %v897
    %v902 = vadd.f32 %v886, %v898
    %s903 = sadd.s32 %s55, 32
    %s904 = smul.addr %s903, 4
    %s905 = scalar_lea.vmem %s0, %s904
    %v906 = vld [vmem:[%s905] sm:$0xff]
    %v907 = vld [vmem:[%s905 + $0x8] sm:$0xff]
    %v908 = vunpack.c.l.bf16 %v906
    %v909 = vunpack.c.h.bf16 %v906
    %v910 = vunpack.c.l.bf16 %v907
    %v911 = vunpack.c.h.bf16 %v907
    %v912 = vmul.f32 %v908, %v137
    %v913 = vmul.f32 %v909, %v137
    %v914 = vmul.f32 %v910, %v137
    %v915 = vmul.f32 %v911, %v137
    %v916 = vadd.f32 %v891, %v912
    %v917 = vadd.f32 %v892, %v913
    %v918 = vadd.f32 %v893, %v914
    %v919 = vadd.f32 %v894, %v915
    %v920 = vmul.f32 %v908, %v146
    %v921 = vmul.f32 %v909, %v146
    %v922 = vmul.f32 %v910, %v146
    %v923 = vmul.f32 %v911, %v146
    %v924 = vadd.f32 %v899, %v920
    %v925 = vadd.f32 %v900, %v921
    %v926 = vadd.f32 %v901, %v922
    %v927 = vadd.f32 %v902, %v923
    %v928 = vmul.f32 %v241, %v164
    %v929 = vmul.f32 %v242, %v164
    %v930 = vmul.f32 %v243, %v164
    %v931 = vmul.f32 %v244, %v164
    %v932 = vadd.f32 %v916, %v928
    %v933 = vadd.f32 %v917, %v929
    %v934 = vadd.f32 %v918, %v930
    %v935 = vadd.f32 %v919, %v931
    %v936 = vmul.f32 %v241, %v173
    %v937 = vmul.f32 %v242, %v173
    %v938 = vmul.f32 %v243, %v173
    %v939 = vmul.f32 %v244, %v173
    %v940 = vadd.f32 %v924, %v936
    %v941 = vadd.f32 %v925, %v937
    %v942 = vadd.f32 %v926, %v938
    %v943 = vadd.f32 %v927, %v939
    %v944 = vmul.f32 %v507, %v191
    %v945 = vmul.f32 %v508, %v191
    %v946 = vmul.f32 %v509, %v191
    %v947 = vmul.f32 %v510, %v191
    %v948 = vadd.f32 %v932, %v944
    %v949 = vadd.f32 %v933, %v945
    %v950 = vadd.f32 %v934, %v946
    %v951 = vadd.f32 %v935, %v947
    %v952 = vmul.f32 %v507, %v200
    %v953 = vmul.f32 %v508, %v200
    %v954 = vmul.f32 %v509, %v200
    %v955 = vmul.f32 %v510, %v200
    %v956 = vadd.f32 %v940, %v952
    %v957 = vadd.f32 %v941, %v953
    %v958 = vadd.f32 %v942, %v954
    %v959 = vadd.f32 %v943, %v955
    %v960 = vmul.f32 %v753, %v218
    %v961 = vmul.f32 %v754, %v218
    %v962 = vmul.f32 %v755, %v218
    %v963 = vmul.f32 %v756, %v218
    %v964 = vadd.f32 %v948, %v960
    %v965 = vadd.f32 %v949, %v961
    %v966 = vadd.f32 %v950, %v962
    %v967 = vadd.f32 %v951, %v963
    %v968 = vmul.f32 %v753, %v227
    %v969 = vmul.f32 %v754, %v227
    %v970 = vmul.f32 %v755, %v227
    %v971 = vmul.f32 %v756, %v227
    %v972 = vadd.f32 %v956, %v968
    %v973 = vadd.f32 %v957, %v969
    %v974 = vadd.f32 %v958, %v970
    %v975 = vadd.f32 %v959, %v971
    %s976 = sadd.s32 %s55, 68
    %s977 = smul.addr %s976, 4
    %s978 = scalar_lea.vmem %s0, %s977
    %v979 = vld [vmem:[%s978] sm:$0xff]
    %v980 = vld [vmem:[%s978 + $0x8] sm:$0xff]
    %v981 = vunpack.c.l.bf16 %v979
    %v982 = vunpack.c.h.bf16 %v979
    %v983 = vunpack.c.l.bf16 %v980
    %v984 = vunpack.c.h.bf16 %v980
    %v985 = vmul.f32 %v981, %v245
    %v986 = vmul.f32 %v982, %v245
    %v987 = vmul.f32 %v983, %v245
    %v988 = vmul.f32 %v984, %v245
    %v989 = vadd.f32 %v964, %v985
    %v990 = vadd.f32 %v965, %v986
    %v991 = vadd.f32 %v966, %v987
    %v992 = vadd.f32 %v967, %v988
    %v993 = vmul.f32 %v981, %v254
    %v994 = vmul.f32 %v982, %v254
    %v995 = vmul.f32 %v983, %v254
    %v996 = vmul.f32 %v984, %v254
    %v997 = vadd.f32 %v972, %v993
    %v998 = vadd.f32 %v973, %v994
    %v999 = vadd.f32 %v974, %v995
    %v1000 = vadd.f32 %v975, %v996
    %v1001 = vmul.f32 %v349, %v272
    %v1002 = vmul.f32 %v350, %v272
    %v1003 = vmul.f32 %v351, %v272
    %v1004 = vmul.f32 %v352, %v272
    %v1005 = vadd.f32 %v989, %v1001
    %v1006 = vadd.f32 %v990, %v1002
    %v1007 = vadd.f32 %v991, %v1003
    %v1008 = vadd.f32 %v992, %v1004
    %v1009 = vmul.f32 %v349, %v281
    %v1010 = vmul.f32 %v350, %v281
    %v1011 = vmul.f32 %v351, %v281
    %v1012 = vmul.f32 %v352, %v281
    %v1013 = vadd.f32 %v997, %v1009
    %v1014 = vadd.f32 %v998, %v1010
    %v1015 = vadd.f32 %v999, %v1011
    %v1016 = vadd.f32 %v1000, %v1012
    %v1017 = vmul.f32 %v589, %v299
    %v1018 = vmul.f32 %v590, %v299
    %v1019 = vmul.f32 %v591, %v299
    %v1020 = vmul.f32 %v592, %v299
    %v1021 = vadd.f32 %v1005, %v1017
    %v1022 = vadd.f32 %v1006, %v1018
    %v1023 = vadd.f32 %v1007, %v1019
    %v1024 = vadd.f32 %v1008, %v1020
    %v1025 = vmul.f32 %v589, %v308
    %v1026 = vmul.f32 %v590, %v308
    %v1027 = vmul.f32 %v591, %v308
    %v1028 = vmul.f32 %v592, %v308
    %v1029 = vadd.f32 %v1013, %v1025
    %v1030 = vadd.f32 %v1014, %v1026
    %v1031 = vadd.f32 %v1015, %v1027
    %v1032 = vadd.f32 %v1016, %v1028
    %v1033 = vmul.f32 %v835, %v326
    %v1034 = vmul.f32 %v836, %v326
    %v1035 = vmul.f32 %v837, %v326
    %v1036 = vmul.f32 %v838, %v326
    %v1037 = vadd.f32 %v1021, %v1033
    %v1038 = vadd.f32 %v1022, %v1034
    %v1039 = vadd.f32 %v1023, %v1035
    %v1040 = vadd.f32 %v1024, %v1036
    %v1041 = vmul.f32 %v835, %v335
    %v1042 = vmul.f32 %v836, %v335
    %v1043 = vmul.f32 %v837, %v335
    %v1044 = vmul.f32 %v838, %v335
    %v1045 = vadd.f32 %v1029, %v1041
    %v1046 = vadd.f32 %v1030, %v1042
    %v1047 = vadd.f32 %v1031, %v1043
    %v1048 = vadd.f32 %v1032, %v1044
    %s1049 = sadd.s32 %s55, 104
    %s1050 = smul.addr %s1049, 4
    %s1051 = scalar_lea.vmem %s0, %s1050
    %v1052 = vld [vmem:[%s1051] sm:$0xff]
    %v1053 = vld [vmem:[%s1051 + $0x8] sm:$0xff]
    %v1054 = vunpack.c.l.bf16 %v1052
    %v1055 = vunpack.c.h.bf16 %v1052
    %v1056 = vunpack.c.l.bf16 %v1053
    %v1057 = vunpack.c.h.bf16 %v1053
    %v1058 = vmul.f32 %v1054, %v353
    %v1059 = vmul.f32 %v1055, %v353
    %v1060 = vmul.f32 %v1056, %v353
    %v1061 = vmul.f32 %v1057, %v353
    %v1062 = vadd.f32 %v1037, %v1058
    %v1063 = vadd.f32 %v1038, %v1059
    %v1064 = vadd.f32 %v1039, %v1060
    %v1065 = vadd.f32 %v1040, %v1061
    %v1066 = vmul.f32 %v1054, %v362
    %v1067 = vmul.f32 %v1055, %v362
    %v1068 = vmul.f32 %v1056, %v362
    %v1069 = vmul.f32 %v1057, %v362
    %v1070 = vadd.f32 %v1045, %v1066
    %v1071 = vadd.f32 %v1046, %v1067
    %v1072 = vadd.f32 %v1047, %v1068
    %v1073 = vadd.f32 %v1048, %v1069
    %v1074 = vmax.f32 %v855, %v1062
    %v1075 = vmax.f32 %v856, %v1063
    %v1076 = vmax.f32 %v857, %v1064
    %v1077 = vmax.f32 %v858, %v1065
    %v1078 = vmax.f32 %v859, %v1070
    %v1079 = vmax.f32 %v860, %v1071
    %v1080 = vmax.f32 %v861, %v1072
    %v1081 = vmax.f32 %v862, %v1073
    %s1082 = smul.addr %s55, 8
    %s1083 = scalar_lea.vmem [#allocation2], %s1082
    %1084 = vst [vmem:[%s1083] sm:$0xff] %v1074
    %vm1085 = vcmask 793600
    %1086 = vst.msk [vmem:[%s1083 + $0x8] sm:$0xff] %vm1085, %v1075
    %1087 = vst [vmem:[%s1083 + $0x10] sm:$0xff] %v1076
    %1088 = vst.msk [vmem:[%s1083 + $0x18] sm:$0xff] %vm1085, %v1077
    %s1089 = smul.addr %s74, 8
    %s1090 = scalar_lea.vmem [#allocation2], %s1089
    %1091 = vst [vmem:[%s1090] sm:$0xff] %v1078
    %1092 = vst.msk [vmem:[%s1090 + $0x8] sm:$0xff] %vm1085, %v1079
    %1093 = vst [vmem:[%s1090 + $0x10] sm:$0xff] %v1080
    %1094 = vst.msk [vmem:[%s1090 + $0x18] sm:$0xff] %vm1085, %v1081
    %v1095 = vld [vmem:[%s3] sm:$0x1]
    %v1096 = vld [vmem:[#allocation2] sm:$0xff]
    %v1097 = vld [vmem:[#allocation2 + $0x8] sm:$0xff]
    %v1098 = vld [vmem:[#allocation2 + $0x10] sm:$0xff]
    %v1099 = vld [vmem:[#allocation2 + $0x18] sm:$0xff]
    %v1100 = vld [vmem:[%s2] sm:$0xff]
    %v1101 = vld [vmem:[%s2 + $0x8] sm:$0xff]
    %v1102 = vld [vmem:[%s2 + $0x10] sm:$0xff]
    %v1103 = vld [vmem:[%s2 + $0x18] sm:$0xff]
    %v1104 = vld [vmem:[%s2 + $0x20] sm:$0xff]
    %v1105 = vld [vmem:[%s2 + $0x28] sm:$0xff]
    %v1106 = vld [vmem:[%s2 + $0x30] sm:$0xff]
    %v1107 = vld [vmem:[%s2 + $0x38] sm:$0xff]
    %v1108 = vld [vmem:[%s2 + $0x40] sm:$0xff]
    %v1109 = vld [vmem:[%s2 + $0x48] sm:$0xff]
    %v1110 = vld [vmem:[%s2 + $0x50] sm:$0xff]
    %v1111 = vld [vmem:[%s2 + $0x58] sm:$0xff]
    %v1112 = vld [vmem:[%s2 + $0x60] sm:$0xff]
    %v1113 = vld [vmem:[%s2 + $0x68] sm:$0xff]
    %v1114 = vld [vmem:[%s2 + $0x70] sm:$0xff]
    %v1115 = vld [vmem:[%s2 + $0x78] sm:$0xff]
    %v1116 = vld [vmem:[%s2 + $0x80] sm:$0xff]
    %v1117 = vld [vmem:[%s2 + $0x88] sm:$0xff]
    %v1118 = vld [vmem:[%s2 + $0x90] sm:$0xff]
    %v1119 = vld [vmem:[%s2 + $0x98] sm:$0xff]
    %v1120 = vld [vmem:[%s2 + $0xa0] sm:$0xff]
    %v1121 = vld [vmem:[%s2 + $0xa8] sm:$0xff]
    %v1122 = vld [vmem:[%s2 + $0xb0] sm:$0xff]
    %v1123 = vld [vmem:[%s2 + $0xb8] sm:$0xff]
    %v1124 = vld [vmem:[%s2 + $0xc0] sm:$0xff]
    %v1125 = vld [vmem:[%s2 + $0xc8] sm:$0xff]
    %v1126 = vld [vmem:[%s2 + $0xd0] sm:$0xff]
    %v1127 = vld [vmem:[%s2 + $0xd8] sm:$0xff]
    %v1128 = vld [vmem:[%s2 + $0xe0] sm:$0x1]
    %v1130 = vsel %vm1085, %v1097, 0
    %v1133 = vsel %vm1085, %v1099, 0
    %vm1135 = vcmask 1040384
    %v1137 = vsel %vm1135, %v1128, 0
    %1139 = vmatprep.subr.mxu0 0.0
    %1140 = vmatpush1.msra.mxu0 %v1100
    %1141 = vmatprep.subr.mxu0 0.0
    %1142 = vmatpush1.msra.mxu0 %v1101
    %1143 = vmatprep.subr.mxu0 0.0
    %1144 = vmatpush1.msra.mxu0 %v1102
    %1145 = vmatprep.subr.mxu0 0.0
    %1146 = vmatpush1.msra.mxu0 %v1103
    %1147 = vmatprep.subr.mxu0 0.0
    %1148 = vmatpush1.msra.mxu0 %v1104
    %1149 = vmatprep.subr.mxu0 0.0
    %1150 = vmatpush1.msra.mxu0 %v1105
    %1151 = vmatprep.subr.mxu0 0.0
    %1152 = vmatpush1.msra.mxu0 %v1106
    %1153 = vmatprep.subr.mxu0 0.0
    %1154 = vmatpush1.msra.mxu0 %v1107
    %1155 = vmatprep.subr.mxu0 0.0
    %1156 = vmatpush1.msra.mxu0 %v1108
    %1157 = vmatprep.subr.mxu0 0.0
    %1158 = vmatpush1.msra.mxu0 %v1109
    %1159 = vmatprep.subr.mxu0 0.0
    %1160 = vmatpush1.msra.mxu0 %v1110
    %1161 = vmatprep.subr.mxu0 0.0
    %1162 = vmatpush1.msra.mxu0 %v1111
    %1163 = vmatprep.subr.mxu0 0.0
    %1164 = vmatpush1.msra.mxu0 %v1112
    %1165 = vmatprep.subr.mxu0 0.0
    %1166 = vmatpush1.msra.mxu0 %v1113
    %1167 = vmatprep.subr.mxu0 0.0
    %1168 = vmatpush1.msra.mxu0 %v1114
    %1169 = vmatprep.subr.mxu0 0.0
    %1170 = vmatpush1.msra.mxu0 %v1115
    %1171 = vmatprep.subr.mxu0 0.0
    %1172 = vmatpush1.msra.mxu0 %v1116
    %1173 = vmatprep.subr.mxu0 0.0
    %1174 = vmatpush1.msra.mxu0 %v1117
    %1175 = vmatprep.subr.mxu0 0.0
    %1176 = vmatpush1.msra.mxu0 %v1118
    %1177 = vmatprep.subr.mxu0 0.0
    %1178 = vmatpush1.msra.mxu0 %v1119
    %1179 = vmatprep.subr.mxu0 0.0
    %1180 = vmatpush1.msra.mxu0 %v1120
    %1181 = vmatprep.subr.mxu0 0.0
    %1182 = vmatpush1.msra.mxu0 %v1121
    %1183 = vmatprep.subr.mxu0 0.0
    %1184 = vmatpush1.msra.mxu0 %v1122
    %1185 = vmatprep.subr.mxu0 0.0
    %1186 = vmatpush1.msra.mxu0 %v1123
    %1187 = vmatprep.subr.mxu0 0.0
    %1188 = vmatpush1.msra.mxu0 %v1124
    %1189 = vmatprep.subr.mxu0 0.0
    %1190 = vmatpush1.msra.mxu0 %v1125
    %1191 = vmatprep.subr.mxu0 0.0
    %1192 = vmatpush1.msra.mxu0 %v1126
    %1193 = vmatprep.subr.mxu0 0.0
    %1194 = vmatpush1.msra.mxu0 %v1127
    %1195 = vmatprep.subr.mxu0 0.0
    %1196 = vmatpush1.msra.mxu0 %v1137
    %1197 = vmatprep.subr.mxu0 0.0
    %1198 = vmatpush1.msra.mxu0 0.0
    %1199 = vmatprep.subr.mxu0 0.0
    %1200 = vmatpush1.msra.mxu0 0.0
    %1201 = vmatprep.subr.mxu0 0.0
    %1202 = vmatpush1.msra.mxu0 0.0
    %1203 = vmatprep.mubr.f32.mxu0 %v1130
    %1204 = vmatmul.mubr.f32.gmra.mrb[0].mxu0 %v1096
    %v1205 = vpop.f32.mrb[0].mxu0
    %v1206 = vadd.f32 0.0, %v1205
    %v1207 = vpop.f32.mrb[0].mxu0
    %1208 = vmatprep.mubr.f32.mxu0 %v1133
    %1209 = vmatmul.mubr.f32.gmra.mrb[0].mxu0 %v1098
    %v1210 = vpop.f32.mrb[0].mxu0
    %v1211 = vadd.f32 0.0, %v1210
    %v1212 = vpop.f32.mrb[0].mxu0
    %1213 = vdwg.mxu0
    %v1215 = vlaneseq
    %v1216 = vshrl.u32 %v1215, 7
    %v1217 = vsub.s32 0, %v1216
    %v1218 = vrot.slane %v1095, %v1217
    %v1220 = vadd.f32 %v1218, %v1206
    %v1221 = vadd.f32 %v1218, %v1211
    %s1222 = scalar_lea.vmem [#allocation2], 32
    %v1223 = vld [vmem:[%s1222] sm:$0xff]
    %v1224 = vld [vmem:[%s1222 + $0x8] sm:$0xff]
    %v1225 = vld [vmem:[%s1222 + $0x10] sm:$0xff]
    %v1226 = vld [vmem:[%s1222 + $0x18] sm:$0xff]
    %s1227 = scalar_lea.vmem %s2, 232
    %v1228 = vld [vmem:[%s1227] sm:$0xff]
    %v1229 = vld [vmem:[%s1227 + $0x8] sm:$0xff]
    %v1230 = vld [vmem:[%s1227 + $0x10] sm:$0xff]
    %v1231 = vld [vmem:[%s1227 + $0x18] sm:$0xff]
    %v1232 = vld [vmem:[%s1227 + $0x20] sm:$0xff]
    %v1233 = vld [vmem:[%s1227 + $0x28] sm:$0xff]
    %v1234 = vld [vmem:[%s1227 + $0x30] sm:$0xff]
    %v1235 = vld [vmem:[%s1227 + $0x38] sm:$0xff]
    %v1236 = vld [vmem:[%s1227 + $0x40] sm:$0xff]
    %v1237 = vld [vmem:[%s1227 + $0x48] sm:$0xff]
    %v1238 = vld [vmem:[%s1227 + $0x50] sm:$0xff]
    %v1239 = vld [vmem:[%s1227 + $0x58] sm:$0xff]
    %v1240 = vld [vmem:[%s1227 + $0x60] sm:$0xff]
    %v1241 = vld [vmem:[%s1227 + $0x68] sm:$0xff]
    %v1242 = vld [vmem:[%s1227 + $0x70] sm:$0xff]
    %v1243 = vld [vmem:[%s1227 + $0x78] sm:$0xff]
    %v1244 = vld [vmem:[%s1227 + $0x80] sm:$0xff]
    %v1245 = vld [vmem:[%s1227 + $0x88] sm:$0xff]
    %v1246 = vld [vmem:[%s1227 + $0x90] sm:$0xff]
    %v1247 = vld [vmem:[%s1227 + $0x98] sm:$0xff]
    %v1248 = vld [vmem:[%s1227 + $0xa0] sm:$0xff]
    %v1249 = vld [vmem:[%s1227 + $0xa8] sm:$0xff]
    %v1250 = vld [vmem:[%s1227 + $0xb0] sm:$0xff]
    %v1251 = vld [vmem:[%s1227 + $0xb8] sm:$0xff]
    %v1252 = vld [vmem:[%s1227 + $0xc0] sm:$0xff]
    %v1253 = vld [vmem:[%s1227 + $0xc8] sm:$0xff]
    %v1254 = vld [vmem:[%s1227 + $0xd0] sm:$0xff]
    %v1255 = vld [vmem:[%s1227 + $0xd8] sm:$0xff]
    %v1256 = vld [vmem:[%s1227 + $0xe0] sm:$0x1]
    %v1258 = vsel %vm1085, %v1224, 0
    %v1261 = vsel %vm1085, %v1226, 0
    %v1264 = vsel %vm1135, %v1256, 0
    %1266 = vmatprep.subr.mxu0 0.0
    %1267 = vmatpush1.msra.mxu0 %v1228
    %1268 = vmatprep.subr.mxu0 0.0
    %1269 = vmatpush1.msra.mxu0 %v1229
    %1270 = vmatprep.subr.mxu0 0.0
    %1271 = vmatpush1.msra.mxu0 %v1230
    %1272 = vmatprep.subr.mxu0 0.0
    %1273 = vmatpush1.msra.mxu0 %v1231
    %1274 = vmatprep.subr.mxu0 0.0
    %1275 = vmatpush1.msra.mxu0 %v1232
    %1276 = vmatprep.subr.mxu0 0.0
    %1277 = vmatpush1.msra.mxu0 %v1233
    %1278 = vmatprep.subr.mxu0 0.0
    %1279 = vmatpush1.msra.mxu0 %v1234
    %1280 = vmatprep.subr.mxu0 0.0
    %1281 = vmatpush1.msra.mxu0 %v1235
    %1282 = vmatprep.subr.mxu0 0.0
    %1283 = vmatpush1.msra.mxu0 %v1236
    %1284 = vmatprep.subr.mxu0 0.0
    %1285 = vmatpush1.msra.mxu0 %v1237
    %1286 = vmatprep.subr.mxu0 0.0
    %1287 = vmatpush1.msra.mxu0 %v1238
    %1288 = vmatprep.subr.mxu0 0.0
    %1289 = vmatpush1.msra.mxu0 %v1239
    %1290 = vmatprep.subr.mxu0 0.0
    %1291 = vmatpush1.msra.mxu0 %v1240
    %1292 = vmatprep.subr.mxu0 0.0
    %1293 = vmatpush1.msra.mxu0 %v1241
    %1294 = vmatprep.subr.mxu0 0.0
    %1295 = vmatpush1.msra.mxu0 %v1242
    %1296 = vmatprep.subr.mxu0 0.0
    %1297 = vmatpush1.msra.mxu0 %v1243
    %1298 = vmatprep.subr.mxu0 0.0
    %1299 = vmatpush1.msra.mxu0 %v1244
    %1300 = vmatprep.subr.mxu0 0.0
    %1301 = vmatpush1.msra.mxu0 %v1245
    %1302 = vmatprep.subr.mxu0 0.0
    %1303 = vmatpush1.msra.mxu0 %v1246
    %1304 = vmatprep.subr.mxu0 0.0
    %1305 = vmatpush1.msra.mxu0 %v1247
    %1306 = vmatprep.subr.mxu0 0.0
    %1307 = vmatpush1.msra.mxu0 %v1248
    %1308 = vmatprep.subr.mxu0 0.0
    %1309 = vmatpush1.msra.mxu0 %v1249
    %1310 = vmatprep.subr.mxu0 0.0
    %1311 = vmatpush1.msra.mxu0 %v1250
    %1312 = vmatprep.subr.mxu0 0.0
    %1313 = vmatpush1.msra.mxu0 %v1251
    %1314 = vmatprep.subr.mxu0 0.0
    %1315 = vmatpush1.msra.mxu0 %v1252
    %1316 = vmatprep.subr.mxu0 0.0
    %1317 = vmatpush1.msra.mxu0 %v1253
    %1318 = vmatprep.subr.mxu0 0.0
    %1319 = vmatpush1.msra.mxu0 %v1254
    %1320 = vmatprep.subr.mxu0 0.0
    %1321 = vmatpush1.msra.mxu0 %v1255
    %1322 = vmatprep.subr.mxu0 0.0
    %1323 = vmatpush1.msra.mxu0 %v1264
    %1324 = vmatprep.subr.mxu0 0.0
    %1325 = vmatpush1.msra.mxu0 0.0
    %1326 = vmatprep.subr.mxu0 0.0
    %1327 = vmatpush1.msra.mxu0 0.0
    %1328 = vmatprep.subr.mxu0 0.0
    %1329 = vmatpush1.msra.mxu0 0.0
    %1330 = vmatprep.mubr.f32.mxu0 %v1258
    %1331 = vmatmul.mubr.f32.gmra.mrb[0].mxu0 %v1223
    %v1332 = vpop.f32.mrb[0].mxu0
    %v1333 = vadd.f32 0.0, %v1332
    %v1334 = vpop.f32.mrb[0].mxu0
    %1335 = vmatprep.mubr.f32.mxu0 %v1261
    %1336 = vmatmul.mubr.f32.gmra.mrb[0].mxu0 %v1225
    %v1337 = vpop.f32.mrb[0].mxu0
    %v1338 = vadd.f32 0.0, %v1337
    %v1339 = vpop.f32.mrb[0].mxu0
    %1340 = vdwg.mxu0
    %v1341 = vadd.f32 %v1220, %v1333
    %v1342 = vadd.f32 %v1221, %v1338
    %1343 = vst [vmem:[#allocation6] sm:$0xff] %v1341
    %1344 = vst [vmem:[#allocation6 + $0x8] sm:$0xff] %v1342
    // Predicated region
    $region22: #{tpu_custom_call.1} parent=1 // pred_check
      _
    $region23: #{tpu_custom_call.1} parent=1 // pred_check_branch
      %1346 = sbr.rel (0) target = $region25
    $region24: #{tpu_custom_call.1} parent=1 // pred_region
      %s1348 = ssub.s32 256, 256
      %1349 = vsyncadd [#allocation4], %s1348
      %s1350 = sshll.u32 [#allocation6], 4
      %s1351 = int_to_ptr.vmem [resolvable:$true] %s1350
      %1356 = dma.vmem_to_hbm [thread:$0]  %s1351, 256, %s4, [#allocation4], 128, 128, 8
    $region25: #{tpu_custom_call.1} parent=1 // pred_fallthru
      _
    // Predicated region
    $region26: #{tpu_custom_call.1} parent=1 // pred_check
      _
    $region27: #{tpu_custom_call.1} parent=1 // pred_check_branch
      %1358 = sbr.rel (0) target = $region29
    $region28: #{tpu_custom_call.1} parent=1 // pred_region
      %1359 = dma.done [#allocation4], 256
    $region29: #{tpu_custom_call.1} parent=1 // pred_fallthru
      _
    %1360 = vsyncpa [#allocation4], 1
    %1361 = vsyncpa [#allocation5], 1

</llo_original>
